<compile_context>
chip_gen: v6e
topology: v6e:2x2x1
jax: 0.10.0
libtpu: 0.0.40
codegen_flags: <defaults>
</compile_context>

<pallas_src>
import functools

import jax
import jax.numpy as jnp
from jax.experimental import pallas as pl
from jax.experimental.pallas import tpu as pltpu

LANE = 128
SUBLANE = 8


def _round_up(n, m):
    return ((n + m - 1) // m) * m


# ----------------------------------------------------------------------------
# Kernel
# ----------------------------------------------------------------------------
def lstm_kernel(
    x_ref,      # (TT, Bp, I)   f32   time-major input chunk
    wih0_ref,   # (I,  4*Hp)    bf16
    whh0_ref,   # (Hp, 4*Hp)    bf16
    b0_ref,     # (1,  4*Hp)    f32   (b_ih_l0 + b_hh_l0, gate-padded)
    w1_ref,     # (2*Hp, 4*Hp)  bf16  fused [W_ih_l1 ; W_hh_l1]
    b1_ref,     # (1,  4*Hp)    f32
    wfc_ref,    # (Hp, 128)     f32   (real weights in column 0)
    bfc_ref,    # (1, 128)      f32
    out_ref,    # (Bp, 128)     f32
    h0_sc, c0_sc, h1_sc, c1_sc,   # (Bp, Hp) f32 VMEM scratch, persist over grid
    *, hp, tt,
):
    t_chunk = pl.program_id(1)

    @pl.when(t_chunk == 0)
    def _():
        h0_sc[...] = jnp.zeros_like(h0_sc)
        c0_sc[...] = jnp.zeros_like(c0_sc)
        h1_sc[...] = jnp.zeros_like(h1_sc)
        c1_sc[...] = jnp.zeros_like(c1_sc)

    bp = h0_sc.shape[0]

    # Hoisted layer-0 input projection for the whole chunk: one matmul of
    # (TT*Bp, I) @ (I, 4*Hp) instead of TT small ones (recurrence-independent).
    x2d = x_ref[...].reshape(tt * bp, -1).astype(jnp.bfloat16)
    xg = jnp.dot(x2d, wih0_ref[...], preferred_element_type=jnp.float32)

    b0 = b0_ref[...]
    b1 = b1_ref[...]
    h0, c0 = h0_sc[...], c0_sc[...]
    h1, c1 = h1_sc[...], c1_sc[...]

    def gates_to_state(gates, c):
        # Lane-aligned gate slices (hp is a multiple of 128). PyTorch order i,f,g,o.
        i = jax.nn.sigmoid(gates[:, 0 * hp:1 * hp])
        f = jax.nn.sigmoid(gates[:, 1 * hp:2 * hp])
        g = jnp.tanh(gates[:, 2 * hp:3 * hp])
        o = jax.nn.sigmoid(gates[:, 3 * hp:4 * hp])
        c_new = f * c + i * g
        h_new = o * jnp.tanh(c_new)
        return h_new, c_new

    # Fully unrolled (static trip count) inner recurrence over the chunk.
    for ts in range(tt):
        # Layer 0: only the recurrent matmul remains per step.
        g0 = (xg[ts * bp:(ts + 1) * bp, :]
              + jnp.dot(h0.astype(jnp.bfloat16), whh0_ref[...],
                        preferred_element_type=jnp.float32)
              + b0)
        h0, c0 = gates_to_state(g0, c0)

        # Layer 1: single fused matmul over [h0_new | h1] (concat boundary is a
        # 128-lane multiple -> free).
        cat = jnp.concatenate([h0, h1], axis=-1).astype(jnp.bfloat16)
        g1 = jnp.dot(cat, w1_ref[...], preferred_element_type=jnp.float32) + b1
        h1, c1 = gates_to_state(g1, c1)

    h0_sc[...], c0_sc[...] = h0, c0
    h1_sc[...], c1_sc[...] = h1, c1

    # FC on the current top-layer hidden state; written every chunk (cheap),
    # final writeback carries the last timestep's value. Lane-dense (Bp,128) store.
    out_ref[...] = (jnp.dot(h1, wfc_ref[...], preferred_element_type=jnp.float32)
                    + bfc_ref[...]).astype(out_ref.dtype)


# ----------------------------------------------------------------------------
# Wrapper
# ----------------------------------------------------------------------------
@functools.partial(jax.jit, static_argnames=("tt",))
def lstm_model_forward(x, kparams, *, tt=4):
    """x: (B, T, I) float32. Returns (B,) float32 (matches out.squeeze())."""
    B, T, I = x.shape
    HP = kparams["whh0"].shape[0]
    assert T % tt == 0, "T must be divisible by the time chunk tt"
    BP = _round_up(B, SUBLANE)
    BT = BP                      # one batch tile here; axis kept for v7x megacore
    n_b, n_t = BP // BT, T // tt

    # Pad batch to the sublane granule, present time-major so each timestep is a
    # contiguous sublane-aligned row group. (Wrapper-side layout plumbing.)
    x_p = jnp.zeros((BP, T, I), jnp.float32).at[:B].set(x.astype(jnp.float32))
    x_tm = jnp.transpose(x_p, (1, 0, 2))          # (T, BP, I)

    const = lambda shape: pl.BlockSpec(shape, lambda b, t: tuple(0 for _ in shape))

    out = pl.pallas_call(
        functools.partial(lstm_kernel, hp=HP, tt=tt),
        out_shape=jax.ShapeDtypeStruct((BP, LANE), jnp.float32),
        grid_spec=pltpu.PrefetchScalarGridSpec(
            num_scalar_prefetch=0,
            grid=(n_b, n_t),
            in_specs=[
                pl.BlockSpec((tt, BT, I), lambda b, t: (t, b, 0)),  # x chunk
                const((I, 4 * HP)),        # wih0 (bf16)
                const((HP, 4 * HP)),       # whh0 (bf16)
                const((1, 4 * HP)),        # b0
                const((2 * HP, 4 * HP)),   # fused layer-1 weights (bf16)
                const((1, 4 * HP)),        # b1
                const((HP, LANE)),         # wfc
                const((1, LANE)),          # bfc
            ],
            out_specs=pl.BlockSpec((BT, LANE), lambda b, t: (b, 0)),
            scratch_shapes=[pltpu.VMEM((BT, HP), jnp.float32)] * 4,  # h0,c0,h1,c1
        ),
        compiler_params=pltpu.CompilerParams(
            dimension_semantics=("parallel", "arbitrary"),  # batch || , time seq
        ),
    )(
        x_tm,
        kparams["wih0"], kparams["whh0"], kparams["b0"],
        kparams["w1"], kparams["b1"],
        kparams["wfc"], kparams["bfc"],
    )
    return out[:B, 0]


# ----------------------------------------------------------------------------
# Parameters (PyTorch layout) + packing into the padded kernel layout
# ----------------------------------------------------------------------------
def init_torch_like_params(key, input_size, hidden_size):
    """Same shapes / uniform(-1/sqrt(H), 1/sqrt(H)) init as nn.LSTM + nn.Linear."""
    H, I = hidden_size, input_size
    bound = 1.0 / (H ** 0.5)
    ks = jax.random.split(key, 10)
    u = lambda k, s: jax.random.uniform(k, s, jnp.float32, -bound, bound)
    return dict(
        w_ih_l0=u(ks[0], (4 * H, I)), w_hh_l0=u(ks[1], (4 * H, H)),
        b_ih_l0=u(ks[2], (4 * H,)),   b_hh_l0=u(ks[3], (4 * H,)),
        w_ih_l1=u(ks[4], (4 * H, H)), w_hh_l1=u(ks[5], (4 * H, H)),
        b_ih_l1=u(ks[6], (4 * H,)),   b_hh_l1=u(ks[7], (4 * H,)),
        w_fc=u(ks[8], (1, H)),        b_fc=u(ks[9], (1,)),
    )


def pack_kernel_params(p, hidden_size, input_size):
    """Transpose, pad H->Hp (multiple of 128) per gate, fuse layer-1 weights,
    pre-sum biases, widen FC to 128 lanes, store matmul weights in bf16.
    Zero padding keeps padded hidden/cell lanes exactly 0 through the recurrence."""
    H, I = hidden_size, input_size
    HP = _round_up(H, LANE)

    def gate_cols(w_t, k_pad):
        # w_t: (K, 4H) -> (k_pad, 4*HP); gate g occupies columns [g*HP, g*HP+H).
        K = w_t.shape[0]
        out = jnp.zeros((k_pad, 4 * HP), jnp.float32)
        for g in range(4):
            out = out.at[:K, g * HP:g * HP + H].set(w_t[:, g * H:(g + 1) * H])
        return out

    wih0 = gate_cols(p["w_ih_l0"].T, I)
    whh0 = gate_cols(p["w_hh_l0"].T, HP)
    b0 = gate_cols((p["b_ih_l0"] + p["b_hh_l0"])[None, :], 1)
    wih1 = gate_cols(p["w_ih_l1"].T, HP)
    whh1 = gate_cols(p["w_hh_l1"].T, HP)
    w1 = jnp.concatenate([wih1, whh1], axis=0)           # (2*HP, 4*HP)
    b1 = gate_cols((p["b_ih_l1"] + p["b_hh_l1"])[None, :], 1)

    wfc = jnp.zeros((HP, LANE), jnp.float32).at[:H, 0].set(p["w_fc"][0])
    bfc = jnp.zeros((1, LANE), jnp.float32).at[0, 0].set(p["b_fc"][0])

    return dict(
        wih0=wih0.astype(jnp.bfloat16),
        whh0=whh0.astype(jnp.bfloat16),
        b0=b0,
        w1=w1.astype(jnp.bfloat16),
        b1=b1,
        wfc=wfc, bfc=bfc,
    )


# ----------------------------------------------------------------------------
# Pure-JAX reference (built directly from the PyTorch-layout params; gate order
# i, f, g, o per torch.nn.LSTM docs).  mxu_dtype=bf16 mirrors the kernel's
# operand casting exactly for a tight comparison.
# ----------------------------------------------------------------------------
def reference_forward(x, p, hidden_size, mxu_dtype=jnp.float32):
    B, T, I = x.shape
    H = hidden_size
    wih0, whh0 = p["w_ih_l0"].T, p["w_hh_l0"].T
    wih1, whh1 = p["w_ih_l1"].T, p["w_hh_l1"].T
    b0 = (p["b_ih_l0"] + p["b_hh_l0"])[None, :]
    b1 = (p["b_ih_l1"] + p["b_hh_l1"])[None, :]

    def cell(x_in, h, c, w_ih, w_hh, b):
        gates = (jnp.dot(x_in.astype(mxu_dtype), w_ih.astype(mxu_dtype),
                         preferred_element_type=jnp.float32)
                 + jnp.dot(h.astype(mxu_dtype), w_hh.astype(mxu_dtype),
                           preferred_element_type=jnp.float32)
                 + b)
        i = jax.nn.sigmoid(gates[:, 0 * H:1 * H])
        f = jax.nn.sigmoid(gates[:, 1 * H:2 * H])
        g = jnp.tanh(gates[:, 2 * H:3 * H])
        o = jax.nn.sigmoid(gates[:, 3 * H:4 * H])
        c_new = f * c + i * g
        return o * jnp.tanh(c_new), c_new

    def step(carry, x_t):
        h0, c0, h1, c1 = carry
        h0, c0 = cell(x_t, h0, c0, wih0, whh0, b0)
        h1, c1 = cell(h0, h1, c1, wih1, whh1, b1)
        return (h0, c0, h1, c1), None

    init = tuple(jnp.zeros((B, H), jnp.float32) for _ in range(4))
    (h0, c0, h1, c1), _ = jax.lax.scan(step, init, jnp.swapaxes(x, 0, 1))
    out = jnp.dot(h1, p["w_fc"].T) + p["b_fc"]
    return jnp.squeeze(out, axis=-1)


if __name__ == "__main__":
    B, T, I, H = 2, 8, 16, 64    # batch, seq, input_size, hidden_size (module default 64)

    key = jax.random.PRNGKey(0)
    k_x, k_p = jax.random.split(key)
    x = jax.random.normal(k_x, (B, T, I), jnp.float32)

    torch_params = init_torch_like_params(k_p, input_size=I, hidden_size=H)
    kernel_params = pack_kernel_params(torch_params, hidden_size=H, input_size=I)

    y = lstm_model_forward(x, kernel_params, tt=4)
    y = jax.block_until_ready(y)
    assert y.shape == (B,), f"unexpected output shape {y.shape}"

    # Strict check vs a reference that mirrors the kernel's bf16 MXU operands.
    y_bf16 = reference_forward(x, torch_params, H, mxu_dtype=jnp.bfloat16)
    assert jnp.allclose(y, y_bf16, atol=1e-4, rtol=1e-3), (y, y_bf16)

    # Loose sanity check vs the full-f32 reference (bounds bf16 operand error).
    y_f32 = reference_forward(x, torch_params, H, mxu_dtype=jnp.float32)
    assert jnp.allclose(y, y_f32, atol=1e-1), (y, y_f32)

    print("KERNEL_OK")
</pallas_src>

<mosaic_0001>
module attributes {stable_mosaic.version = 11 : i64} {
  func.func @lstm_kernel(%arg0: i32, %arg1: i32, %arg2: memref<4x8x16xf32, #tpu.memory_space<vmem>>, %arg3: memref<16x512xbf16, #tpu.memory_space<vmem>>, %arg4: memref<128x512xbf16, #tpu.memory_space<vmem>>, %arg5: memref<1x512xf32, #tpu.memory_space<vmem>>, %arg6: memref<256x512xbf16, #tpu.memory_space<vmem>>, %arg7: memref<1x512xf32, #tpu.memory_space<vmem>>, %arg8: memref<128x128xf32, #tpu.memory_space<vmem>>, %arg9: memref<1x128xf32, #tpu.memory_space<vmem>>, %arg10: memref<8x128xf32, #tpu.memory_space<vmem>>, %arg11: memref<8x128xf32, #tpu.memory_space<vmem>>, %arg12: memref<8x128xf32, #tpu.memory_space<vmem>>, %arg13: memref<8x128xf32, #tpu.memory_space<vmem>>, %arg14: memref<8x128xf32, #tpu.memory_space<vmem>>) attributes {dimension_semantics = [#tpu.dimension_semantics<parallel>, #tpu.dimension_semantics<arbitrary>], iteration_bounds = array<i64: 1, 2>, scalar_prefetch = 0 : i64, scratch_operands = 4 : i64, tpu.core_type = #tpu.core_type<tc>, window_params = [{transform_indices = @transform_0, window_bounds = array<i64: 4, 8, 16>}, {pipeline_mode = #tpu.pipeline_mode<synchronous>, transform_indices = @transform_1, window_bounds = array<i64: 16, 512>}, {pipeline_mode = #tpu.pipeline_mode<synchronous>, transform_indices = @transform_2, window_bounds = array<i64: 128, 512>}, {pipeline_mode = #tpu.pipeline_mode<synchronous>, transform_indices = @transform_3, window_bounds = array<i64: 1, 512>}, {pipeline_mode = #tpu.pipeline_mode<synchronous>, transform_indices = @transform_4, window_bounds = array<i64: 256, 512>}, {pipeline_mode = #tpu.pipeline_mode<synchronous>, transform_indices = @transform_5, window_bounds = array<i64: 1, 512>}, {pipeline_mode = #tpu.pipeline_mode<synchronous>, transform_indices = @transform_6, window_bounds = array<i64: 128, 128>}, {pipeline_mode = #tpu.pipeline_mode<synchronous>, transform_indices = @transform_7, window_bounds = array<i64: 1, 128>}, {transform_indices = @transform_8, window_bounds = array<i64: 8, 128>}]} {
    %c0_i32 = arith.constant 0 : i32
    %0 = arith.cmpi eq, %arg1, %c0_i32 : i32
    %1 = arith.extui %0 : i1 to i32
    %c0_i32_0 = arith.constant 0 : i32
    %2 = arith.cmpi ne, %1, %c0_i32_0 : i32
    scf.if %2 {
      %cst_80 = arith.constant 0.000000e+00 : f32
      %276 = vector.broadcast %cst_80 : f32 to vector<8x128xf32>
      %c0_81 = arith.constant 0 : index
      %c0_82 = arith.constant 0 : index
      %277 = vector.load %arg11[%c0_81, %c0_82] : memref<8x128xf32, #tpu.memory_space<vmem>>, vector<8x128xf32>
      tpu.vector_store %arg11[%c0_81, %c0_82], %276 {strides = array<i32>} : memref<8x128xf32, #tpu.memory_space<vmem>>, vector<8x128xf32>,
      %cst_83 = arith.constant 0.000000e+00 : f32
      %278 = vector.broadcast %cst_83 : f32 to vector<8x128xf32>
      %c0_84 = arith.constant 0 : index
      %c0_85 = arith.constant 0 : index
      %279 = vector.load %arg12[%c0_84, %c0_85] : memref<8x128xf32, #tpu.memory_space<vmem>>, vector<8x128xf32>
      tpu.vector_store %arg12[%c0_84, %c0_85], %278 {strides = array<i32>} : memref<8x128xf32, #tpu.memory_space<vmem>>, vector<8x128xf32>,
      %cst_86 = arith.constant 0.000000e+00 : f32
      %280 = vector.broadcast %cst_86 : f32 to vector<8x128xf32>
      %c0_87 = arith.constant 0 : index
      %c0_88 = arith.constant 0 : index
      %281 = vector.load %arg13[%c0_87, %c0_88] : memref<8x128xf32, #tpu.memory_space<vmem>>, vector<8x128xf32>
      tpu.vector_store %arg13[%c0_87, %c0_88], %280 {strides = array<i32>} : memref<8x128xf32, #tpu.memory_space<vmem>>, vector<8x128xf32>,
      %cst_89 = arith.constant 0.000000e+00 : f32
      %282 = vector.broadcast %cst_89 : f32 to vector<8x128xf32>
      %c0_90 = arith.constant 0 : index
      %c0_91 = arith.constant 0 : index
      %283 = vector.load %arg14[%c0_90, %c0_91] : memref<8x128xf32, #tpu.memory_space<vmem>>, vector<8x128xf32>
      tpu.vector_store %arg14[%c0_90, %c0_91], %282 {strides = array<i32>} : memref<8x128xf32, #tpu.memory_space<vmem>>, vector<8x128xf32>,
    } else {
    }
    %c0 = arith.constant 0 : index
    %c0_1 = arith.constant 0 : index
    %c0_2 = arith.constant 0 : index
    %3 = vector.load %arg2[%c0, %c0_1, %c0_2] : memref<4x8x16xf32, #tpu.memory_space<vmem>>, vector<4x8x16xf32>
    %4 = vector.shape_cast %3 : vector<4x8x16xf32> to vector<32x16xf32>
    %5 = arith.truncf %4 : vector<32x16xf32> to vector<32x16xbf16>
    %c0_3 = arith.constant 0 : index
    %c0_4 = arith.constant 0 : index
    %6 = vector.load %arg3[%c0_3, %c0_4] : memref<16x512xbf16, #tpu.memory_space<vmem>>, vector<16x512xbf16>
    %cst = arith.constant dense<0.000000e+00> : vector<32x512xf32>
    %7 = tpu.matmul %5, %6, %cst {dimension_numbers = #tpu.dot_dimension_numbers<[1], [0], [0], [1], [0, 0, 1, 1], [], []>} : vector<32x16xbf16>, vector<16x512xbf16>, vector<32x512xf32> -> vector<32x512xf32>
    %c0_5 = arith.constant 0 : index
    %c0_6 = arith.constant 0 : index
    %8 = vector.load %arg5[%c0_5, %c0_6] : memref<1x512xf32, #tpu.memory_space<vmem>>, vector<1x512xf32>
    %c0_7 = arith.constant 0 : index
    %c0_8 = arith.constant 0 : index
    %9 = vector.load %arg7[%c0_7, %c0_8] : memref<1x512xf32, #tpu.memory_space<vmem>>, vector<1x512xf32>
    %c0_9 = arith.constant 0 : index
    %c0_10 = arith.constant 0 : index
    %10 = vector.load %arg11[%c0_9, %c0_10] : memref<8x128xf32, #tpu.memory_space<vmem>>, vector<8x128xf32>
    %c0_11 = arith.constant 0 : index
    %c0_12 = arith.constant 0 : index
    %11 = vector.load %arg12[%c0_11, %c0_12] : memref<8x128xf32, #tpu.memory_space<vmem>>, vector<8x128xf32>
    %c0_13 = arith.constant 0 : index
    %c0_14 = arith.constant 0 : index
    %12 = vector.load %arg13[%c0_13, %c0_14] : memref<8x128xf32, #tpu.memory_space<vmem>>, vector<8x128xf32>
    %c0_15 = arith.constant 0 : index
    %c0_16 = arith.constant 0 : index
    %13 = vector.load %arg14[%c0_15, %c0_16] : memref<8x128xf32, #tpu.memory_space<vmem>>, vector<8x128xf32>
    %14 = vector.extract_strided_slice %7 {offsets = [0, 0], sizes = [8, 512], strides = [1, 1]} : vector<32x512xf32> to vector<8x512xf32>
    %15 = arith.truncf %10 : vector<8x128xf32> to vector<8x128xbf16>
    %c0_17 = arith.constant 0 : index
    %c0_18 = arith.constant 0 : index
    %16 = vector.load %arg4[%c0_17, %c0_18] : memref<128x512xbf16, #tpu.memory_space<vmem>>, vector<128x512xbf16>
    %cst_19 = arith.constant dense<0.000000e+00> : vector<8x512xf32>
    %17 = tpu.matmul %15, %16, %cst_19 {dimension_numbers = #tpu.dot_dimension_numbers<[1], [0], [0], [1], [0, 0, 1, 1], [], []>} : vector<8x128xbf16>, vector<128x512xbf16>, vector<8x512xf32> -> vector<8x512xf32>
    %18 = arith.addf %14, %17 : vector<8x512xf32>
    %19 = vector.broadcast %8 : vector<1x512xf32> to vector<8x512xf32>
    %20 = arith.addf %18, %19 : vector<8x512xf32>
    %21 = vector.extract_strided_slice %20 {offsets = [0, 0], sizes = [8, 128], strides = [1, 1]} : vector<8x512xf32> to vector<8x128xf32>
    %22 = arith.negf %21 : vector<8x128xf32>
    %23 = math.exp %22 : vector<8x128xf32>
    %cst_20 = arith.constant 1.000000e+00 : f32
    %24 = vector.broadcast %cst_20 : f32 to vector<8x128xf32>
    %25 = arith.addf %24, %23 : vector<8x128xf32>
    %26 = arith.divf %24, %25 : vector<8x128xf32>
    %27 = vector.extract_strided_slice %20 {offsets = [0, 128], sizes = [8, 128], strides = [1, 1]} : vector<8x512xf32> to vector<8x128xf32>
    %28 = arith.negf %27 : vector<8x128xf32>
    %29 = math.exp %28 : vector<8x128xf32>
    %cst_21 = arith.constant 1.000000e+00 : f32
    %30 = vector.broadcast %cst_21 : f32 to vector<8x128xf32>
    %31 = arith.addf %30, %29 : vector<8x128xf32>
    %32 = arith.divf %30, %31 : vector<8x128xf32>
    %33 = vector.extract_strided_slice %20 {offsets = [0, 256], sizes = [8, 128], strides = [1, 1]} : vector<8x512xf32> to vector<8x128xf32>
    %34 = math.tanh %33 : vector<8x128xf32>
    %35 = vector.extract_strided_slice %20 {offsets = [0, 384], sizes = [8, 128], strides = [1, 1]} : vector<8x512xf32> to vector<8x128xf32>
    %36 = arith.negf %35 : vector<8x128xf32>
    %37 = math.exp %36 : vector<8x128xf32>
    %cst_22 = arith.constant 1.000000e+00 : f32
    %38 = vector.broadcast %cst_22 : f32 to vector<8x128xf32>
    %39 = arith.addf %38, %37 : vector<8x128xf32>
    %40 = arith.divf %38, %39 : vector<8x128xf32>
    %41 = arith.mulf %32, %11 : vector<8x128xf32>
    %42 = arith.mulf %26, %34 : vector<8x128xf32>
    %43 = arith.addf %41, %42 : vector<8x128xf32>
    %44 = math.tanh %43 : vector<8x128xf32>
    %45 = arith.mulf %40, %44 : vector<8x128xf32>
    %46 = tpu.concatenate %45, %12 in 1 : vector<8x128xf32>, vector<8x128xf32> -> vector<8x256xf32>
    %47 = arith.truncf %46 : vector<8x256xf32> to vector<8x256xbf16>
    %c0_23 = arith.constant 0 : index
    %c0_24 = arith.constant 0 : index
    %48 = vector.load %arg6[%c0_23, %c0_24] : memref<256x512xbf16, #tpu.memory_space<vmem>>, vector<256x512xbf16>
    %cst_25 = arith.constant dense<0.000000e+00> : vector<8x512xf32>
    %49 = tpu.matmul %47, %48, %cst_25 {dimension_numbers = #tpu.dot_dimension_numbers<[1], [0], [0], [1], [0, 0, 1, 1], [], []>} : vector<8x256xbf16>, vector<256x512xbf16>, vector<8x512xf32> -> vector<8x512xf32>
    %50 = vector.broadcast %9 : vector<1x512xf32> to vector<8x512xf32>
    %51 = arith.addf %49, %50 : vector<8x512xf32>
    %52 = vector.extract_strided_slice %51 {offsets = [0, 0], sizes = [8, 128], strides = [1, 1]} : vector<8x512xf32> to vector<8x128xf32>
    %53 = arith.negf %52 : vector<8x128xf32>
    %54 = math.exp %53 : vector<8x128xf32>
    %cst_26 = arith.constant 1.000000e+00 : f32
    %55 = vector.broadcast %cst_26 : f32 to vector<8x128xf32>
    %56 = arith.addf %55, %54 : vector<8x128xf32>
    %57 = arith.divf %55, %56 : vector<8x128xf32>
    %58 = vector.extract_strided_slice %51 {offsets = [0, 128], sizes = [8, 128], strides = [1, 1]} : vector<8x512xf32> to vector<8x128xf32>
    %59 = arith.negf %58 : vector<8x128xf32>
    %60 = math.exp %59 : vector<8x128xf32>
    %cst_27 = arith.constant 1.000000e+00 : f32
    %61 = vector.broadcast %cst_27 : f32 to vector<8x128xf32>
    %62 = arith.addf %61, %60 : vector<8x128xf32>
    %63 = arith.divf %61, %62 : vector<8x128xf32>
    %64 = vector.extract_strided_slice %51 {offsets = [0, 256], sizes = [8, 128], strides = [1, 1]} : vector<8x512xf32> to vector<8x128xf32>
    %65 = math.tanh %64 : vector<8x128xf32>
    %66 = vector.extract_strided_slice %51 {offsets = [0, 384], sizes = [8, 128], strides = [1, 1]} : vector<8x512xf32> to vector<8x128xf32>
    %67 = arith.negf %66 : vector<8x128xf32>
    %68 = math.exp %67 : vector<8x128xf32>
    %cst_28 = arith.constant 1.000000e+00 : f32
    %69 = vector.broadcast %cst_28 : f32 to vector<8x128xf32>
    %70 = arith.addf %69, %68 : vector<8x128xf32>
    %71 = arith.divf %69, %70 : vector<8x128xf32>
    %72 = arith.mulf %63, %13 : vector<8x128xf32>
    %73 = arith.mulf %57, %65 : vector<8x128xf32>
    %74 = arith.addf %72, %73 : vector<8x128xf32>
    %75 = math.tanh %74 : vector<8x128xf32>
    %76 = arith.mulf %71, %75 : vector<8x128xf32>
    %77 = vector.extract_strided_slice %7 {offsets = [8, 0], sizes = [8, 512], strides = [1, 1]} : vector<32x512xf32> to vector<8x512xf32>
    %78 = arith.truncf %45 : vector<8x128xf32> to vector<8x128xbf16>
    %c0_29 = arith.constant 0 : index
    %c0_30 = arith.constant 0 : index
    %79 = vector.load %arg4[%c0_29, %c0_30] : memref<128x512xbf16, #tpu.memory_space<vmem>>, vector<128x512xbf16>
    %cst_31 = arith.constant dense<0.000000e+00> : vector<8x512xf32>
    %80 = tpu.matmul %78, %79, %cst_31 {dimension_numbers = #tpu.dot_dimension_numbers<[1], [0], [0], [1], [0, 0, 1, 1], [], []>} : vector<8x128xbf16>, vector<128x512xbf16>, vector<8x512xf32> -> vector<8x512xf32>
    %81 = arith.addf %77, %80 : vector<8x512xf32>
    %82 = vector.broadcast %8 : vector<1x512xf32> to vector<8x512xf32>
    %83 = arith.addf %81, %82 : vector<8x512xf32>
    %84 = vector.extract_strided_slice %83 {offsets = [0, 0], sizes = [8, 128], strides = [1, 1]} : vector<8x512xf32> to vector<8x128xf32>
    %85 = arith.negf %84 : vector<8x128xf32>
    %86 = math.exp %85 : vector<8x128xf32>
    %cst_32 = arith.constant 1.000000e+00 : f32
    %87 = vector.broadcast %cst_32 : f32 to vector<8x128xf32>
    %88 = arith.addf %87, %86 : vector<8x128xf32>
    %89 = arith.divf %87, %88 : vector<8x128xf32>
    %90 = vector.extract_strided_slice %83 {offsets = [0, 128], sizes = [8, 128], strides = [1, 1]} : vector<8x512xf32> to vector<8x128xf32>
    %91 = arith.negf %90 : vector<8x128xf32>
    %92 = math.exp %91 : vector<8x128xf32>
    %cst_33 = arith.constant 1.000000e+00 : f32
    %93 = vector.broadcast %cst_33 : f32 to vector<8x128xf32>
    %94 = arith.addf %93, %92 : vector<8x128xf32>
    %95 = arith.divf %93, %94 : vector<8x128xf32>
    %96 = vector.extract_strided_slice %83 {offsets = [0, 256], sizes = [8, 128], strides = [1, 1]} : vector<8x512xf32> to vector<8x128xf32>
    %97 = math.tanh %96 : vector<8x128xf32>
    %98 = vector.extract_strided_slice %83 {offsets = [0, 384], sizes = [8, 128], strides = [1, 1]} : vector<8x512xf32> to vector<8x128xf32>
    %99 = arith.negf %98 : vector<8x128xf32>
    %100 = math.exp %99 : vector<8x128xf32>
    %cst_34 = arith.constant 1.000000e+00 : f32
    %101 = vector.broadcast %cst_34 : f32 to vector<8x128xf32>
    %102 = arith.addf %101, %100 : vector<8x128xf32>
    %103 = arith.divf %101, %102 : vector<8x128xf32>
    %104 = arith.mulf %95, %43 : vector<8x128xf32>
    %105 = arith.mulf %89, %97 : vector<8x128xf32>
    %106 = arith.addf %104, %105 : vector<8x128xf32>
    %107 = math.tanh %106 : vector<8x128xf32>
    %108 = arith.mulf %103, %107 : vector<8x128xf32>
    %109 = tpu.concatenate %108, %76 in 1 : vector<8x128xf32>, vector<8x128xf32> -> vector<8x256xf32>
    %110 = arith.truncf %109 : vector<8x256xf32> to vector<8x256xbf16>
    %c0_35 = arith.constant 0 : index
    %c0_36 = arith.constant 0 : index
    %111 = vector.load %arg6[%c0_35, %c0_36] : memref<256x512xbf16, #tpu.memory_space<vmem>>, vector<256x512xbf16>
    %cst_37 = arith.constant dense<0.000000e+00> : vector<8x512xf32>
    %112 = tpu.matmul %110, %111, %cst_37 {dimension_numbers = #tpu.dot_dimension_numbers<[1], [0], [0], [1], [0, 0, 1, 1], [], []>} : vector<8x256xbf16>, vector<256x512xbf16>, vector<8x512xf32> -> vector<8x512xf32>
    %113 = vector.broadcast %9 : vector<1x512xf32> to vector<8x512xf32>
    %114 = arith.addf %112, %113 : vector<8x512xf32>
    %115 = vector.extract_strided_slice %114 {offsets = [0, 0], sizes = [8, 128], strides = [1, 1]} : vector<8x512xf32> to vector<8x128xf32>
    %116 = arith.negf %115 : vector<8x128xf32>
    %117 = math.exp %116 : vector<8x128xf32>
    %cst_38 = arith.constant 1.000000e+00 : f32
    %118 = vector.broadcast %cst_38 : f32 to vector<8x128xf32>
    %119 = arith.addf %118, %117 : vector<8x128xf32>
    %120 = arith.divf %118, %119 : vector<8x128xf32>
    %121 = vector.extract_strided_slice %114 {offsets = [0, 128], sizes = [8, 128], strides = [1, 1]} : vector<8x512xf32> to vector<8x128xf32>
    %122 = arith.negf %121 : vector<8x128xf32>
    %123 = math.exp %122 : vector<8x128xf32>
    %cst_39 = arith.constant 1.000000e+00 : f32
    %124 = vector.broadcast %cst_39 : f32 to vector<8x128xf32>
    %125 = arith.addf %124, %123 : vector<8x128xf32>
    %126 = arith.divf %124, %125 : vector<8x128xf32>
    %127 = vector.extract_strided_slice %114 {offsets = [0, 256], sizes = [8, 128], strides = [1, 1]} : vector<8x512xf32> to vector<8x128xf32>
    %128 = math.tanh %127 : vector<8x128xf32>
    %129 = vector.extract_strided_slice %114 {offsets = [0, 384], sizes = [8, 128], strides = [1, 1]} : vector<8x512xf32> to vector<8x128xf32>
    %130 = arith.negf %129 : vector<8x128xf32>
    %131 = math.exp %130 : vector<8x128xf32>
    %cst_40 = arith.constant 1.000000e+00 : f32
    %132 = vector.broadcast %cst_40 : f32 to vector<8x128xf32>
    %133 = arith.addf %132, %131 : vector<8x128xf32>
    %134 = arith.divf %132, %133 : vector<8x128xf32>
    %135 = arith.mulf %126, %74 : vector<8x128xf32>
    %136 = arith.mulf %120, %128 : vector<8x128xf32>
    %137 = arith.addf %135, %136 : vector<8x128xf32>
    %138 = math.tanh %137 : vector<8x128xf32>
    %139 = arith.mulf %134, %138 : vector<8x128xf32>
    %140 = vector.extract_strided_slice %7 {offsets = [16, 0], sizes = [8, 512], strides = [1, 1]} : vector<32x512xf32> to vector<8x512xf32>
    %141 = arith.truncf %108 : vector<8x128xf32> to vector<8x128xbf16>
    %c0_41 = arith.constant 0 : index
    %c0_42 = arith.constant 0 : index
    %142 = vector.load %arg4[%c0_41, %c0_42] : memref<128x512xbf16, #tpu.memory_space<vmem>>, vector<128x512xbf16>
    %cst_43 = arith.constant dense<0.000000e+00> : vector<8x512xf32>
    %143 = tpu.matmul %141, %142, %cst_43 {dimension_numbers = #tpu.dot_dimension_numbers<[1], [0], [0], [1], [0, 0, 1, 1], [], []>} : vector<8x128xbf16>, vector<128x512xbf16>, vector<8x512xf32> -> vector<8x512xf32>
    %144 = arith.addf %140, %143 : vector<8x512xf32>
    %145 = vector.broadcast %8 : vector<1x512xf32> to vector<8x512xf32>
    %146 = arith.addf %144, %145 : vector<8x512xf32>
    %147 = vector.extract_strided_slice %146 {offsets = [0, 0], sizes = [8, 128], strides = [1, 1]} : vector<8x512xf32> to vector<8x128xf32>
    %148 = arith.negf %147 : vector<8x128xf32>
    %149 = math.exp %148 : vector<8x128xf32>
    %cst_44 = arith.constant 1.000000e+00 : f32
    %150 = vector.broadcast %cst_44 : f32 to vector<8x128xf32>
    %151 = arith.addf %150, %149 : vector<8x128xf32>
    %152 = arith.divf %150, %151 : vector<8x128xf32>
    %153 = vector.extract_strided_slice %146 {offsets = [0, 128], sizes = [8, 128], strides = [1, 1]} : vector<8x512xf32> to vector<8x128xf32>
    %154 = arith.negf %153 : vector<8x128xf32>
    %155 = math.exp %154 : vector<8x128xf32>
    %cst_45 = arith.constant 1.000000e+00 : f32
    %156 = vector.broadcast %cst_45 : f32 to vector<8x128xf32>
    %157 = arith.addf %156, %155 : vector<8x128xf32>
    %158 = arith.divf %156, %157 : vector<8x128xf32>
    %159 = vector.extract_strided_slice %146 {offsets = [0, 256], sizes = [8, 128], strides = [1, 1]} : vector<8x512xf32> to vector<8x128xf32>
    %160 = math.tanh %159 : vector<8x128xf32>
    %161 = vector.extract_strided_slice %146 {offsets = [0, 384], sizes = [8, 128], strides = [1, 1]} : vector<8x512xf32> to vector<8x128xf32>
    %162 = arith.negf %161 : vector<8x128xf32>
    %163 = math.exp %162 : vector<8x128xf32>
    %cst_46 = arith.constant 1.000000e+00 : f32
    %164 = vector.broadcast %cst_46 : f32 to vector<8x128xf32>
    %165 = arith.addf %164, %163 : vector<8x128xf32>
    %166 = arith.divf %164, %165 : vector<8x128xf32>
    %167 = arith.mulf %158, %106 : vector<8x128xf32>
    %168 = arith.mulf %152, %160 : vector<8x128xf32>
    %169 = arith.addf %167, %168 : vector<8x128xf32>
    %170 = math.tanh %169 : vector<8x128xf32>
    %171 = arith.mulf %166, %170 : vector<8x128xf32>
    %172 = tpu.concatenate %171, %139 in 1 : vector<8x128xf32>, vector<8x128xf32> -> vector<8x256xf32>
    %173 = arith.truncf %172 : vector<8x256xf32> to vector<8x256xbf16>
    %c0_47 = arith.constant 0 : index
    %c0_48 = arith.constant 0 : index
    %174 = vector.load %arg6[%c0_47, %c0_48] : memref<256x512xbf16, #tpu.memory_space<vmem>>, vector<256x512xbf16>
    %cst_49 = arith.constant dense<0.000000e+00> : vector<8x512xf32>
    %175 = tpu.matmul %173, %174, %cst_49 {dimension_numbers = #tpu.dot_dimension_numbers<[1], [0], [0], [1], [0, 0, 1, 1], [], []>} : vector<8x256xbf16>, vector<256x512xbf16>, vector<8x512xf32> -> vector<8x512xf32>
    %176 = vector.broadcast %9 : vector<1x512xf32> to vector<8x512xf32>
    %177 = arith.addf %175, %176 : vector<8x512xf32>
    %178 = vector.extract_strided_slice %177 {offsets = [0, 0], sizes = [8, 128], strides = [1, 1]} : vector<8x512xf32> to vector<8x128xf32>
    %179 = arith.negf %178 : vector<8x128xf32>
    %180 = math.exp %179 : vector<8x128xf32>
    %cst_50 = arith.constant 1.000000e+00 : f32
    %181 = vector.broadcast %cst_50 : f32 to vector<8x128xf32>
    %182 = arith.addf %181, %180 : vector<8x128xf32>
    %183 = arith.divf %181, %182 : vector<8x128xf32>
    %184 = vector.extract_strided_slice %177 {offsets = [0, 128], sizes = [8, 128], strides = [1, 1]} : vector<8x512xf32> to vector<8x128xf32>
    %185 = arith.negf %184 : vector<8x128xf32>
    %186 = math.exp %185 : vector<8x128xf32>
    %cst_51 = arith.constant 1.000000e+00 : f32
    %187 = vector.broadcast %cst_51 : f32 to vector<8x128xf32>
    %188 = arith.addf %187, %186 : vector<8x128xf32>
    %189 = arith.divf %187, %188 : vector<8x128xf32>
    %190 = vector.extract_strided_slice %177 {offsets = [0, 256], sizes = [8, 128], strides = [1, 1]} : vector<8x512xf32> to vector<8x128xf32>
    %191 = math.tanh %190 : vector<8x128xf32>
    %192 = vector.extract_strided_slice %177 {offsets = [0, 384], sizes = [8, 128], strides = [1, 1]} : vector<8x512xf32> to vector<8x128xf32>
    %193 = arith.negf %192 : vector<8x128xf32>
    %194 = math.exp %193 : vector<8x128xf32>
    %cst_52 = arith.constant 1.000000e+00 : f32
    %195 = vector.broadcast %cst_52 : f32 to vector<8x128xf32>
    %196 = arith.addf %195, %194 : vector<8x128xf32>
    %197 = arith.divf %195, %196 : vector<8x128xf32>
    %198 = arith.mulf %189, %137 : vector<8x128xf32>
    %199 = arith.mulf %183, %191 : vector<8x128xf32>
    %200 = arith.addf %198, %199 : vector<8x128xf32>
    %201 = math.tanh %200 : vector<8x128xf32>
    %202 = arith.mulf %197, %201 : vector<8x128xf32>
    %203 = vector.extract_strided_slice %7 {offsets = [24, 0], sizes = [8, 512], strides = [1, 1]} : vector<32x512xf32> to vector<8x512xf32>
    %204 = arith.truncf %171 : vector<8x128xf32> to vector<8x128xbf16>
    %c0_53 = arith.constant 0 : index
    %c0_54 = arith.constant 0 : index
    %205 = vector.load %arg4[%c0_53, %c0_54] : memref<128x512xbf16, #tpu.memory_space<vmem>>, vector<128x512xbf16>
    %cst_55 = arith.constant dense<0.000000e+00> : vector<8x512xf32>
    %206 = tpu.matmul %204, %205, %cst_55 {dimension_numbers = #tpu.dot_dimension_numbers<[1], [0], [0], [1], [0, 0, 1, 1], [], []>} : vector<8x128xbf16>, vector<128x512xbf16>, vector<8x512xf32> -> vector<8x512xf32>
    %207 = arith.addf %203, %206 : vector<8x512xf32>
    %208 = vector.broadcast %8 : vector<1x512xf32> to vector<8x512xf32>
    %209 = arith.addf %207, %208 : vector<8x512xf32>
    %210 = vector.extract_strided_slice %209 {offsets = [0, 0], sizes = [8, 128], strides = [1, 1]} : vector<8x512xf32> to vector<8x128xf32>
    %211 = arith.negf %210 : vector<8x128xf32>
    %212 = math.exp %211 : vector<8x128xf32>
    %cst_56 = arith.constant 1.000000e+00 : f32
    %213 = vector.broadcast %cst_56 : f32 to vector<8x128xf32>
    %214 = arith.addf %213, %212 : vector<8x128xf32>
    %215 = arith.divf %213, %214 : vector<8x128xf32>
    %216 = vector.extract_strided_slice %209 {offsets = [0, 128], sizes = [8, 128], strides = [1, 1]} : vector<8x512xf32> to vector<8x128xf32>
    %217 = arith.negf %216 : vector<8x128xf32>
    %218 = math.exp %217 : vector<8x128xf32>
    %cst_57 = arith.constant 1.000000e+00 : f32
    %219 = vector.broadcast %cst_57 : f32 to vector<8x128xf32>
    %220 = arith.addf %219, %218 : vector<8x128xf32>
    %221 = arith.divf %219, %220 : vector<8x128xf32>
    %222 = vector.extract_strided_slice %209 {offsets = [0, 256], sizes = [8, 128], strides = [1, 1]} : vector<8x512xf32> to vector<8x128xf32>
    %223 = math.tanh %222 : vector<8x128xf32>
    %224 = vector.extract_strided_slice %209 {offsets = [0, 384], sizes = [8, 128], strides = [1, 1]} : vector<8x512xf32> to vector<8x128xf32>
    %225 = arith.negf %224 : vector<8x128xf32>
    %226 = math.exp %225 : vector<8x128xf32>
    %cst_58 = arith.constant 1.000000e+00 : f32
    %227 = vector.broadcast %cst_58 : f32 to vector<8x128xf32>
    %228 = arith.addf %227, %226 : vector<8x128xf32>
    %229 = arith.divf %227, %228 : vector<8x128xf32>
    %230 = arith.mulf %221, %169 : vector<8x128xf32>
    %231 = arith.mulf %215, %223 : vector<8x128xf32>
    %232 = arith.addf %230, %231 : vector<8x128xf32>
    %233 = math.tanh %232 : vector<8x128xf32>
    %234 = arith.mulf %229, %233 : vector<8x128xf32>
    %235 = tpu.concatenate %234, %202 in 1 : vector<8x128xf32>, vector<8x128xf32> -> vector<8x256xf32>
    %236 = arith.truncf %235 : vector<8x256xf32> to vector<8x256xbf16>
    %c0_59 = arith.constant 0 : index
    %c0_60 = arith.constant 0 : index
    %237 = vector.load %arg6[%c0_59, %c0_60] : memref<256x512xbf16, #tpu.memory_space<vmem>>, vector<256x512xbf16>
    %cst_61 = arith.constant dense<0.000000e+00> : vector<8x512xf32>
    %238 = tpu.matmul %236, %237, %cst_61 {dimension_numbers = #tpu.dot_dimension_numbers<[1], [0], [0], [1], [0, 0, 1, 1], [], []>} : vector<8x256xbf16>, vector<256x512xbf16>, vector<8x512xf32> -> vector<8x512xf32>
    %239 = vector.broadcast %9 : vector<1x512xf32> to vector<8x512xf32>
    %240 = arith.addf %238, %239 : vector<8x512xf32>
    %241 = vector.extract_strided_slice %240 {offsets = [0, 0], sizes = [8, 128], strides = [1, 1]} : vector<8x512xf32> to vector<8x128xf32>
    %242 = arith.negf %241 : vector<8x128xf32>
    %243 = math.exp %242 : vector<8x128xf32>
    %cst_62 = arith.constant 1.000000e+00 : f32
    %244 = vector.broadcast %cst_62 : f32 to vector<8x128xf32>
    %245 = arith.addf %244, %243 : vector<8x128xf32>
    %246 = arith.divf %244, %245 : vector<8x128xf32>
    %247 = vector.extract_strided_slice %240 {offsets = [0, 128], sizes = [8, 128], strides = [1, 1]} : vector<8x512xf32> to vector<8x128xf32>
    %248 = arith.negf %247 : vector<8x128xf32>
    %249 = math.exp %248 : vector<8x128xf32>
    %cst_63 = arith.constant 1.000000e+00 : f32
    %250 = vector.broadcast %cst_63 : f32 to vector<8x128xf32>
    %251 = arith.addf %250, %249 : vector<8x128xf32>
    %252 = arith.divf %250, %251 : vector<8x128xf32>
    %253 = vector.extract_strided_slice %240 {offsets = [0, 256], sizes = [8, 128], strides = [1, 1]} : vector<8x512xf32> to vector<8x128xf32>
    %254 = math.tanh %253 : vector<8x128xf32>
    %255 = vector.extract_strided_slice %240 {offsets = [0, 384], sizes = [8, 128], strides = [1, 1]} : vector<8x512xf32> to vector<8x128xf32>
    %256 = arith.negf %255 : vector<8x128xf32>
    %257 = math.exp %256 : vector<8x128xf32>
    %cst_64 = arith.constant 1.000000e+00 : f32
    %258 = vector.broadcast %cst_64 : f32 to vector<8x128xf32>
    %259 = arith.addf %258, %257 : vector<8x128xf32>
    %260 = arith.divf %258, %259 : vector<8x128xf32>
    %261 = arith.mulf %252, %200 : vector<8x128xf32>
    %262 = arith.mulf %246, %254 : vector<8x128xf32>
    %263 = arith.addf %261, %262 : vector<8x128xf32>
    %264 = math.tanh %263 : vector<8x128xf32>
    %265 = arith.mulf %260, %264 : vector<8x128xf32>
    %c0_65 = arith.constant 0 : index
    %c0_66 = arith.constant 0 : index
    %266 = vector.load %arg11[%c0_65, %c0_66] : memref<8x128xf32, #tpu.memory_space<vmem>>, vector<8x128xf32>
    tpu.vector_store %arg11[%c0_65, %c0_66], %234 {strides = array<i32>} : memref<8x128xf32, #tpu.memory_space<vmem>>, vector<8x128xf32>,
    %c0_67 = arith.constant 0 : index
    %c0_68 = arith.constant 0 : index
    %267 = vector.load %arg12[%c0_67, %c0_68] : memref<8x128xf32, #tpu.memory_space<vmem>>, vector<8x128xf32>
    tpu.vector_store %arg12[%c0_67, %c0_68], %232 {strides = array<i32>} : memref<8x128xf32, #tpu.memory_space<vmem>>, vector<8x128xf32>,
    %c0_69 = arith.constant 0 : index
    %c0_70 = arith.constant 0 : index
    %268 = vector.load %arg13[%c0_69, %c0_70] : memref<8x128xf32, #tpu.memory_space<vmem>>, vector<8x128xf32>
    tpu.vector_store %arg13[%c0_69, %c0_70], %265 {strides = array<i32>} : memref<8x128xf32, #tpu.memory_space<vmem>>, vector<8x128xf32>,
    %c0_71 = arith.constant 0 : index
    %c0_72 = arith.constant 0 : index
    %269 = vector.load %arg14[%c0_71, %c0_72] : memref<8x128xf32, #tpu.memory_space<vmem>>, vector<8x128xf32>
    tpu.vector_store %arg14[%c0_71, %c0_72], %263 {strides = array<i32>} : memref<8x128xf32, #tpu.memory_space<vmem>>, vector<8x128xf32>,
    %c0_73 = arith.constant 0 : index
    %c0_74 = arith.constant 0 : index
    %270 = vector.load %arg8[%c0_73, %c0_74] : memref<128x128xf32, #tpu.memory_space<vmem>>, vector<128x128xf32>
    %cst_75 = arith.constant dense<0.000000e+00> : vector<8x128xf32>
    %271 = tpu.matmul %265, %270, %cst_75 {dimension_numbers = #tpu.dot_dimension_numbers<[1], [0], [0], [1], [0, 0, 1, 1], [], []>} : vector<8x128xf32>, vector<128x128xf32>, vector<8x128xf32> -> vector<8x128xf32>
    %c0_76 = arith.constant 0 : index
    %c0_77 = arith.constant 0 : index
    %272 = vector.load %arg9[%c0_76, %c0_77] : memref<1x128xf32, #tpu.memory_space<vmem>>, vector<1x128xf32>
    %273 = vector.broadcast %272 : vector<1x128xf32> to vector<8x128xf32>
    %274 = arith.addf %271, %273 : vector<8x128xf32>
    %c0_78 = arith.constant 0 : index
    %c0_79 = arith.constant 0 : index
    %275 = vector.load %arg10[%c0_78, %c0_79] : memref<8x128xf32, #tpu.memory_space<vmem>>, vector<8x128xf32>
    tpu.vector_store %arg10[%c0_78, %c0_79], %274 {strides = array<i32>} : memref<8x128xf32, #tpu.memory_space<vmem>>, vector<8x128xf32>,
    return
  }
  func.func @transform_0(%arg0: i32, %arg1: i32) -> (i32, i32, i32) {
    %c0_i32 = arith.constant 0 : i32
    %c0_i32_0 = arith.constant 0 : i32
    return %arg1, %arg0, %c0_i32 : i32, i32, i32
  }
  func.func @transform_1(%arg0: i32, %arg1: i32) -> (i32, i32) {
    %c0_i32 = arith.constant 0 : i32
    %c0_i32_0 = arith.constant 0 : i32
    %c0_i32_1 = arith.constant 0 : i32
    return %c0_i32, %c0_i32_0 : i32, i32
  }
  func.func @transform_2(%arg0: i32, %arg1: i32) -> (i32, i32) {
    %c0_i32 = arith.constant 0 : i32
    %c0_i32_0 = arith.constant 0 : i32
    %c0_i32_1 = arith.constant 0 : i32
    return %c0_i32, %c0_i32_0 : i32, i32
  }
  func.func @transform_3(%arg0: i32, %arg1: i32) -> (i32, i32) {
    %c0_i32 = arith.constant 0 : i32
    %c0_i32_0 = arith.constant 0 : i32
    %c0_i32_1 = arith.constant 0 : i32
    return %c0_i32, %c0_i32_0 : i32, i32
  }
  func.func @transform_4(%arg0: i32, %arg1: i32) -> (i32, i32) {
    %c0_i32 = arith.constant 0 : i32
    %c0_i32_0 = arith.constant 0 : i32
    %c0_i32_1 = arith.constant 0 : i32
    return %c0_i32, %c0_i32_0 : i32, i32
  }
  func.func @transform_5(%arg0: i32, %arg1: i32) -> (i32, i32) {
    %c0_i32 = arith.constant 0 : i32
    %c0_i32_0 = arith.constant 0 : i32
    %c0_i32_1 = arith.constant 0 : i32
    return %c0_i32, %c0_i32_0 : i32, i32
  }
  func.func @transform_6(%arg0: i32, %arg1: i32) -> (i32, i32) {
    %c0_i32 = arith.constant 0 : i32
    %c0_i32_0 = arith.constant 0 : i32
    %c0_i32_1 = arith.constant 0 : i32
    return %c0_i32, %c0_i32_0 : i32, i32
  }
  func.func @transform_7(%arg0: i32, %arg1: i32) -> (i32, i32) {
    %c0_i32 = arith.constant 0 : i32
    %c0_i32_0 = arith.constant 0 : i32
    %c0_i32_1 = arith.constant 0 : i32
    return %c0_i32, %c0_i32_0 : i32, i32
  }
  func.func @transform_8(%arg0: i32, %arg1: i32) -> (i32, i32) {
    %c0_i32 = arith.constant 0 : i32
    %c0_i32_0 = arith.constant 0 : i32
    return %arg0, %c0_i32 : i32, i32
  }
}

</mosaic_0001>

<llo_original>
// kernel: lstm_model_forward.1
$region0: #{lstm_model_forward.1}
  #allocation0 [shape = 'u32[]', space=smem, size = 0x4, offset = 0x4, fixed_abs, tag = 'smem constant byte address 0x4 - core index']
  #allocation1 [shape = 'u32[144,128]{1,0:T(1,128)}', space=vmem, size = 0x12000, scoped, tag = 'internal scratch']
  #allocation2 [shape = 'f32[8,128]{1,0:T(8,128)}', space=vmem, size = 0x1000, scoped, tag = 'scratch operand']
  #allocation3 [shape = 'f32[8,128]{1,0:T(8,128)}', space=vmem, size = 0x1000, scoped, tag = 'scratch operand']
  #allocation4 [shape = 'f32[8,128]{1,0:T(8,128)}', space=vmem, size = 0x1000, scoped, tag = 'scratch operand']
  #allocation5 [shape = 'f32[8,128]{1,0:T(8,128)}', space=vmem, size = 0x1000, scoped, tag = 'scratch operand']
  %s0 = inlined_call_operand.vmem [shape: f32[8,8,16], index: 0, kind: input, shape index: {}]
  %s1 = inlined_call_operand.vmem [shape: bf16[16,512], index: 1, kind: input, shape index: {}]
  %s2 = inlined_call_operand.hbm [shape: bf16[128,512], index: 2, kind: input, shape index: {}]
  %s3 = inlined_call_operand.vmem [shape: f32[1,512], index: 3, kind: input, shape index: {}]
  %s4 = inlined_call_operand.hbm [shape: bf16[256,512], index: 4, kind: input, shape index: {}]
  %s5 = inlined_call_operand.vmem [shape: f32[1,512], index: 5, kind: input, shape index: {}]
  %s6 = inlined_call_operand.hbm [shape: f32[128,128], index: 6, kind: input, shape index: {}]
  %s7 = inlined_call_operand.vmem [shape: f32[1,128], index: 7, kind: input, shape index: {}]
  %s8 = inlined_call_operand.vmem [shape: f32[8,128], index: 8, kind: output, shape index: {}]
  %s9 = sld [smem:[#allocation0]]
  $region81: #{lstm_model_forward.1} parent=0
    _
  %s11 = ssub.s32 1, %s9
  %s12 = scalar_select 0, %s11, %s9
  $region1: #{lstm_model_forward.1} parent=0
    #allocation6 [shape = 'u8[131072]{0}', space=vmem, size = 0x20000, scoped, tag = 'input window, operand 2, single buffered']
    #allocation7 [shape = 's32[2]{0}', space=sflag, size = 0x8, scoped, tag = 'scoped memory for lstm_model_forward.1']
    #allocation8 [shape = 'u8[262144]{0}', space=vmem, size = 0x40000, scoped, tag = 'input window, operand 4, single buffered']
    #allocation9 [shape = 's32[1]{0}', space=sflag, size = 0x4, scoped, tag = 'scoped memory for lstm_model_forward.1']
    #allocation10 [shape = 'u8[65536]{0}', space=vmem, size = 0x10000, scoped, tag = 'input window, operand 6, single buffered']
    %13 = vsyncpa [#allocation7], 0
    %14 = vsyncpa [#allocation9], 0
    loop: start=0, step=1, limit=4
    $region2: #{lstm_model_forward.1} parent=1 // loop_pre_header
      _
    $region3: #{lstm_model_forward.1} parent=1 // loop_header
      %s16 = sphi 0, %s20
      %p17 = scmp.ge.s32.totalorder %s16, 4
      %s23 = sphi 0, %s35
      %s24 = sphi 0, %s31
      %s25 = sphi 0, %s23
      %s26 = sphi 0, %s24
      %s27 = sphi 0, %s25
      %s28 = sphi 0, %s26
      %s40 = sphi 0, %s42
      %s43 = sphi 0, %s40
      %s44 = sphi 0, %s43
      %s60 = sphi 0, %s44
      %s64 = sphi 0, %s64
      %s66 = sphi 0, %s64
      %s67 = sphi 0, %s66
      %s81 = sphi 0, %s67
      %s85 = sphi 0, %s85
      %s87 = sphi 0, %s85
      %s88 = sphi 0, %s87
      %s102 = sphi 0, %s88
      %s106 = sphi 0, %s106
      %s108 = sphi 0, %s106
      %s109 = sphi 0, %s108
      %s123 = sphi 0, %s109
      %s127 = sphi 0, %s127
      %s129 = sphi 0, %s127
      %s130 = sphi 0, %s129
      %s144 = sphi 0, %s130
      %s148 = sphi 0, %s148
      %s150 = sphi 0, %s148
      %s151 = sphi 0, %s150
      %s165 = sphi 0, %s151
      %s169 = sphi 0, %s169
      %s171 = sphi 0, %s169
      %s172 = sphi 0, %s171
      %s186 = sphi 0, %s172
      %s190 = sphi 0, %s190
      %s192 = sphi 0, %s190
      %s193 = sphi 0, %s192
      %s207 = sphi 0, %s193
      %s213 = sphi 0, %s215
      %s216 = sphi 0, %s213
      %s217 = sphi 0, %s216
      %s233 = sphi 0, %s217
    $region4: #{lstm_model_forward.1} parent=1 // loop_header_branch
      %19 = sbr.rel (%p17) target = $region8
    $region5: #{lstm_model_forward.1} parent=1 // loop_body
      %s21 = ssub.s32 %s16, 1
      %s22 = ssub.s32 %s16, 2
      %s29 = sadd.s32 1, %s24
      %p30 = scmp.ge.s32.totalorder %s29, 2
      %s31 = scalar_select %p30, 0, %s29
      %s32 = sadd.s32 1, %s23
      %s33 = scalar_select %p30, %s32, %s23
      %p34 = scmp.ge.s32.totalorder %s33, 1
      %s35 = scalar_select %p34, 0, %s33
      %s36 = ssub.s32 %s24, %s31
      %s37 = ssub.s32 %s23, %s35
      %s38 = sor.u32 %s36, %s37
      %p39 = scmp.eq.s32.totalorder %s38, 0
      %s41 = sadd.s32 %s40, 1
      %s42 = scalar_select %p39, %s40, %s41
      %p45 = pneg %p39
      %p46 = scmp.eq.s32.totalorder %s16, 1
      %p47 = por %p45, %p46
      %p48 = scmp.ne.s32.totalorder %s40, %s43
      %p49 = scmp.eq.s32.totalorder %s16, 0
      %p50 = por %p48, %p49
      %p51 = scmp.ne.s32.totalorder %s40, %s43
      %p52 = scmp.eq.s32.totalorder %s21, 1
      %p53 = por %p51, %p52
      %p54 = scmp.ne.s32.totalorder %s43, %s44
      %p55 = scmp.eq.s32.totalorder %s21, 0
      %p56 = por %p54, %p55
      %p57 = scmp.ne.s32.totalorder %s43, %s44
      %p58 = scmp.eq.s32.totalorder %s22, 1
      %p59 = por %p57, %p58
      %p61 = scmp.ne.s32.totalorder %s44, %s60
      %p62 = scmp.eq.s32.totalorder %s22, 0
      %p63 = por %p61, %p62
      %s65 = sadd.s32 %s64, 1
      %p68 = scmp.eq.s32.totalorder %s16, 1
      %p69 = scmp.ne.s32.totalorder %s64, %s66
      %p70 = scmp.eq.s32.totalorder %s16, 0
      %p71 = por %p69, %p70
      %p72 = scmp.ne.s32.totalorder %s64, %s66
      %p73 = scmp.eq.s32.totalorder %s21, 1
      %p74 = por %p72, %p73
      %p75 = scmp.ne.s32.totalorder %s66, %s67
      %p76 = scmp.eq.s32.totalorder %s21, 0
      %p77 = por %p75, %p76
      %p78 = scmp.ne.s32.totalorder %s66, %s67
      %p79 = scmp.eq.s32.totalorder %s22, 1
      %p80 = por %p78, %p79
      %p82 = scmp.ne.s32.totalorder %s67, %s81
      %p83 = scmp.eq.s32.totalorder %s22, 0
      %p84 = por %p82, %p83
      %s86 = sadd.s32 %s85, 1
      %p89 = scmp.eq.s32.totalorder %s16, 1
      %p90 = scmp.ne.s32.totalorder %s85, %s87
      %p91 = scmp.eq.s32.totalorder %s16, 0
      %p92 = por %p90, %p91
      %p93 = scmp.ne.s32.totalorder %s85, %s87
      %p94 = scmp.eq.s32.totalorder %s21, 1
      %p95 = por %p93, %p94
      %p96 = scmp.ne.s32.totalorder %s87, %s88
      %p97 = scmp.eq.s32.totalorder %s21, 0
      %p98 = por %p96, %p97
      %p99 = scmp.ne.s32.totalorder %s87, %s88
      %p100 = scmp.eq.s32.totalorder %s22, 1
      %p101 = por %p99, %p100
      %p103 = scmp.ne.s32.totalorder %s88, %s102
      %p104 = scmp.eq.s32.totalorder %s22, 0
      %p105 = por %p103, %p104
      %s107 = sadd.s32 %s106, 1
      %p110 = scmp.eq.s32.totalorder %s16, 1
      %p111 = scmp.ne.s32.totalorder %s106, %s108
      %p112 = scmp.eq.s32.totalorder %s16, 0
      %p113 = por %p111, %p112
      %p114 = scmp.ne.s32.totalorder %s106, %s108
      %p115 = scmp.eq.s32.totalorder %s21, 1
      %p116 = por %p114, %p115
      %p117 = scmp.ne.s32.totalorder %s108, %s109
      %p118 = scmp.eq.s32.totalorder %s21, 0
      %p119 = por %p117, %p118
      %p120 = scmp.ne.s32.totalorder %s108, %s109
      %p121 = scmp.eq.s32.totalorder %s22, 1
      %p122 = por %p120, %p121
      %p124 = scmp.ne.s32.totalorder %s109, %s123
      %p125 = scmp.eq.s32.totalorder %s22, 0
      %p126 = por %p124, %p125
      %s128 = sadd.s32 %s127, 1
      %p131 = scmp.eq.s32.totalorder %s16, 1
      %p132 = scmp.ne.s32.totalorder %s127, %s129
      %p133 = scmp.eq.s32.totalorder %s16, 0
      %p134 = por %p132, %p133
      %p135 = scmp.ne.s32.totalorder %s127, %s129
      %p136 = scmp.eq.s32.totalorder %s21, 1
      %p137 = por %p135, %p136
      %p138 = scmp.ne.s32.totalorder %s129, %s130
      %p139 = scmp.eq.s32.totalorder %s21, 0
      %p140 = por %p138, %p139
      %p141 = scmp.ne.s32.totalorder %s129, %s130
      %p142 = scmp.eq.s32.totalorder %s22, 1
      %p143 = por %p141, %p142
      %p145 = scmp.ne.s32.totalorder %s130, %s144
      %p146 = scmp.eq.s32.totalorder %s22, 0
      %p147 = por %p145, %p146
      %s149 = sadd.s32 %s148, 1
      %p152 = scmp.eq.s32.totalorder %s16, 1
      %p153 = scmp.ne.s32.totalorder %s148, %s150
      %p154 = scmp.eq.s32.totalorder %s16, 0
      %p155 = por %p153, %p154
      %p156 = scmp.ne.s32.totalorder %s148, %s150
      %p157 = scmp.eq.s32.totalorder %s21, 1
      %p158 = por %p156, %p157
      %p159 = scmp.ne.s32.totalorder %s150, %s151
      %p160 = scmp.eq.s32.totalorder %s21, 0
      %p161 = por %p159, %p160
      %p162 = scmp.ne.s32.totalorder %s150, %s151
      %p163 = scmp.eq.s32.totalorder %s22, 1
      %p164 = por %p162, %p163
      %p166 = scmp.ne.s32.totalorder %s151, %s165
      %p167 = scmp.eq.s32.totalorder %s22, 0
      %p168 = por %p166, %p167
      %s170 = sadd.s32 %s169, 1
      %p173 = scmp.eq.s32.totalorder %s16, 1
      %p174 = scmp.ne.s32.totalorder %s169, %s171
      %p175 = scmp.eq.s32.totalorder %s16, 0
      %p176 = por %p174, %p175
      %p177 = scmp.ne.s32.totalorder %s169, %s171
      %p178 = scmp.eq.s32.totalorder %s21, 1
      %p179 = por %p177, %p178
      %p180 = scmp.ne.s32.totalorder %s171, %s172
      %p181 = scmp.eq.s32.totalorder %s21, 0
      %p182 = por %p180, %p181
      %p183 = scmp.ne.s32.totalorder %s171, %s172
      %p184 = scmp.eq.s32.totalorder %s22, 1
      %p185 = por %p183, %p184
      %p187 = scmp.ne.s32.totalorder %s172, %s186
      %p188 = scmp.eq.s32.totalorder %s22, 0
      %p189 = por %p187, %p188
      %s191 = sadd.s32 %s190, 1
      %p194 = scmp.eq.s32.totalorder %s16, 1
      %p195 = scmp.ne.s32.totalorder %s190, %s192
      %p196 = scmp.eq.s32.totalorder %s16, 0
      %p197 = por %p195, %p196
      %p198 = scmp.ne.s32.totalorder %s190, %s192
      %p199 = scmp.eq.s32.totalorder %s21, 1
      %p200 = por %p198, %p199
      %p201 = scmp.ne.s32.totalorder %s192, %s193
      %p202 = scmp.eq.s32.totalorder %s21, 0
      %p203 = por %p201, %p202
      %p204 = scmp.ne.s32.totalorder %s192, %s193
      %p205 = scmp.eq.s32.totalorder %s22, 1
      %p206 = por %p204, %p205
      %p208 = scmp.ne.s32.totalorder %s193, %s207
      %p209 = scmp.eq.s32.totalorder %s22, 0
      %p210 = por %p208, %p209
      %s211 = ssub.s32 %s23, %s35
      %p212 = scmp.eq.s32.totalorder %s211, 0
      %s214 = sadd.s32 %s213, 1
      %s215 = scalar_select %p212, %s213, %s214
      %p218 = pneg %p212
      %p219 = scmp.eq.s32.totalorder %s16, 1
      %p220 = por %p218, %p219
      %p221 = scmp.ne.s32.totalorder %s213, %s216
      %p222 = scmp.eq.s32.totalorder %s16, 0
      %p223 = por %p221, %p222
      %p224 = scmp.ne.s32.totalorder %s213, %s216
      %p225 = scmp.eq.s32.totalorder %s21, 1
      %p226 = por %p224, %p225
      %p227 = scmp.ne.s32.totalorder %s216, %s217
      %p228 = scmp.eq.s32.totalorder %s21, 0
      %p229 = por %p227, %p228
      %p230 = scmp.ne.s32.totalorder %s216, %s217
      %p231 = scmp.eq.s32.totalorder %s22, 1
      %p232 = por %p230, %p231
      %p234 = scmp.ne.s32.totalorder %s217, %s233
      %p235 = scmp.eq.s32.totalorder %s22, 0
      %p236 = por %p234, %p235
      %p237 = scmp.le.s32.totalorder 1, %s16
      %p238 = scmp.lt.s32.totalorder %s16, 3
      %p239 = pnand %p237, %p238
      %p240 = pneg %p239
      // Predicated region
      $region9: #{lstm_model_forward.1} parent=5 // pred_check
        _
      $region10: #{lstm_model_forward.1} parent=5 // pred_check_branch
        %242 = sbr.rel (%p239) target = $region12
      $region11: #{lstm_model_forward.1} parent=5 // pred_region
        %s243 = ssub.s32 %s16, 1
        // Predicated region
        $region13: #{lstm_model_forward.1} parent=11 // pred_check
          %p244 = pneg %p77
        $region14: #{lstm_model_forward.1} parent=11 // pred_check_branch
          %246 = sbr.rel (%p244) target = $region16
        $region15: #{lstm_model_forward.1} parent=11 // pred_region
          _
        $region16: #{lstm_model_forward.1} parent=11 // pred_fallthru
          _
        // Predicated region
        $region17: #{lstm_model_forward.1} parent=11 // pred_check
          %p247 = pneg %p98
        $region18: #{lstm_model_forward.1} parent=11 // pred_check_branch
          %249 = sbr.rel (%p247) target = $region20
        $region19: #{lstm_model_forward.1} parent=11 // pred_region
          %s251 = ssub.s32 4096, 4096
          %252 = vsyncadd [#allocation7], %s251
          %s253 = sshll.u32 [#allocation6], 4
          %s254 = int_to_ptr.vmem [resolvable:$true] %s253
          %259 = dma.hbm_to_vmem [thread:$0]  %s2, 4096, %s254, [#allocation7], 256, 256, 16
        $region20: #{lstm_model_forward.1} parent=11 // pred_fallthru
          _
        // Predicated region
        $region21: #{lstm_model_forward.1} parent=11 // pred_check
          %p260 = pneg %p119
        $region22: #{lstm_model_forward.1} parent=11 // pred_check_branch
          %262 = sbr.rel (%p260) target = $region24
        $region23: #{lstm_model_forward.1} parent=11 // pred_region
          _
        $region24: #{lstm_model_forward.1} parent=11 // pred_fallthru
          _
        // Predicated region
        $region25: #{lstm_model_forward.1} parent=11 // pred_check
          %p263 = pneg %p140
        $region26: #{lstm_model_forward.1} parent=11 // pred_check_branch
          %265 = sbr.rel (%p263) target = $region28
        $region27: #{lstm_model_forward.1} parent=11 // pred_region
          %s267 = ssub.s32 8192, 8192
          %268 = vsyncadd [#allocation9], %s267
          %s269 = sshll.u32 [#allocation8], 4
          %s270 = int_to_ptr.vmem [resolvable:$true] %s269
          %275 = dma.hbm_to_vmem [thread:$0]  %s4, 8192, %s270, [#allocation9], 256, 256, 16
        $region28: #{lstm_model_forward.1} parent=11 // pred_fallthru
          _
        // Predicated region
        $region29: #{lstm_model_forward.1} parent=11 // pred_check
          %p276 = pneg %p161
        $region30: #{lstm_model_forward.1} parent=11 // pred_check_branch
          %278 = sbr.rel (%p276) target = $region32
        $region31: #{lstm_model_forward.1} parent=11 // pred_region
          _
        $region32: #{lstm_model_forward.1} parent=11 // pred_fallthru
          _
        // Predicated region
        $region33: #{lstm_model_forward.1} parent=11 // pred_check
          %p279 = pneg %p182
        $region34: #{lstm_model_forward.1} parent=11 // pred_check_branch
          %281 = sbr.rel (%p279) target = $region36
        $region35: #{lstm_model_forward.1} parent=11 // pred_region
          %s283 = ssub.s32 2048, 2048
          %284 = vsyncadd [#allocation9], %s283
          %s285 = sshll.u32 [#allocation10], 4
          %s286 = int_to_ptr.vmem [resolvable:$true] %s285
          %291 = dma.hbm_to_vmem [thread:$0]  %s6, 2048, %s286, [#allocation9], 128, 128, 8
        $region36: #{lstm_model_forward.1} parent=11 // pred_fallthru
          _
        // Predicated region
        $region37: #{lstm_model_forward.1} parent=11 // pred_check
          %p292 = pneg %p203
        $region38: #{lstm_model_forward.1} parent=11 // pred_check_branch
          %294 = sbr.rel (%p292) target = $region40
        $region39: #{lstm_model_forward.1} parent=11 // pred_region
          _
        $region40: #{lstm_model_forward.1} parent=11 // pred_fallthru
          _
      $region12: #{lstm_model_forward.1} parent=5 // pred_fallthru
        _
      %p295 = scmp.lt.s32.totalorder %s16, 2
      // Predicated region
      $region41: #{lstm_model_forward.1} parent=5 // pred_check
        %p296 = pneg %p295
      $region42: #{lstm_model_forward.1} parent=5 // pred_check_branch
        %298 = sbr.rel (%p296) target = $region44
      $region43: #{lstm_model_forward.1} parent=5 // pred_region
        // Predicated region
        $region45: #{lstm_model_forward.1} parent=43 // pred_check
          %p299 = pneg %p50
        $region46: #{lstm_model_forward.1} parent=43 // pred_check_branch
          %301 = sbr.rel (%p299) target = $region48
        $region47: #{lstm_model_forward.1} parent=43 // pred_region
          %s302 = smul.u32 4, %s24
          %p303 = scmp.lt.s32.totalorder %s302, 7
          %s304 = scalar_select %p303, %s302, 7
          %p305 = scmp.lt.s32.totalorder %s23, 0
          %s306 = scalar_select %p305, %s23, 0
          %s307 = sadd.s32 %s306, %s304
          %s308 = smul.addr %s307, 8
          %s309 = scalar_lea.vmem %s0, %s308
          %s310 = smul.u32 4, %s24
        $region48: #{lstm_model_forward.1} parent=43 // pred_fallthru
          _
      $region44: #{lstm_model_forward.1} parent=5 // pred_fallthru
        _
      %p311 = scmp.le.s32.totalorder 1, %s16
      %p312 = scmp.lt.s32.totalorder %s16, 3
      %p313 = pnand %p311, %p312
      %p314 = pneg %p313
      // Predicated region
      $region49: #{lstm_model_forward.1} parent=5 // pred_check
        _
      $region50: #{lstm_model_forward.1} parent=5 // pred_check_branch
        %316 = sbr.rel (%p313) target = $region52
      $region51: #{lstm_model_forward.1} parent=5 // pred_region
        %s317 = ssub.s32 %s16, 1
        // Predicated region
        $region53: #{lstm_model_forward.1} parent=51 // pred_check
          %p318 = pneg %p98
        $region54: #{lstm_model_forward.1} parent=51 // pred_check_branch
          %320 = sbr.rel (%p318) target = $region56
        $region55: #{lstm_model_forward.1} parent=51 // pred_region
          %321 = dma.done [#allocation7], 4096
        $region56: #{lstm_model_forward.1} parent=51 // pred_fallthru
          _
        // Predicated region
        $region57: #{lstm_model_forward.1} parent=51 // pred_check
          %p322 = pneg %p140
        $region58: #{lstm_model_forward.1} parent=51 // pred_check_branch
          %324 = sbr.rel (%p322) target = $region60
        $region59: #{lstm_model_forward.1} parent=51 // pred_region
          %325 = dma.done [#allocation9], 8192
        $region60: #{lstm_model_forward.1} parent=51 // pred_fallthru
          _
        // Predicated region
        $region61: #{lstm_model_forward.1} parent=51 // pred_check
          %p326 = pneg %p182
        $region62: #{lstm_model_forward.1} parent=51 // pred_check_branch
          %328 = sbr.rel (%p326) target = $region64
        $region63: #{lstm_model_forward.1} parent=51 // pred_region
          %329 = dma.done [#allocation9], 2048
        $region64: #{lstm_model_forward.1} parent=51 // pred_fallthru
          _
        %s330 = smul.u32 4, %s26
        %p331 = scmp.lt.s32.totalorder %s330, 7
        %s332 = scalar_select %p331, %s330, 7
        %p333 = scmp.lt.s32.totalorder %s25, 0
        %s334 = scalar_select %p333, %s25, 0
        %s335 = sadd.s32 %s334, %s332
        %s336 = smul.addr %s335, 8
        %s337 = scalar_lea.vmem %s0, %s336
        %p338 = pneg %p56
        %p339 = pneg %p53
        %p340 = pneg %p77
        %p341 = pneg %p74
        %p342 = pneg %p98
        %p343 = pneg %p95
        %p344 = pneg %p119
        %p345 = pneg %p116
        %p346 = pneg %p140
        %p347 = pneg %p137
        %p348 = pneg %p161
        %p349 = pneg %p158
        %p350 = pneg %p182
        %p351 = pneg %p179
        %p352 = pneg %p203
        %p353 = pneg %p200
        %p354 = pneg %p229
        %p355 = pneg %p226
        %p356 = scmp.lt.s32.totalorder %s25, 0
        %s357 = scalar_select %p356, %s25, 0
        %s358 = smul.addr %s357, 8
        %s359 = scalar_lea.vmem %s8, %s358
        %s360 = smul.u32 4, %s26
        %p361 = scmp.lt.s32.totalorder %s360, 7
        %s362 = scalar_select %p361, %s360, 7
        %p363 = scmp.lt.s32.totalorder %s25, 0
        %s364 = scalar_select %p363, %s25, 0
        %s365 = sadd.s32 %s364, %s362
        %s366 = smul.addr %s365, 8
        %s367 = scalar_lea.vmem %s0, %s366
        %s368 = smul.u32 4, %s26
        %p369 = scmp.lt.s32.totalorder %s25, 0
        %s370 = scalar_select %p369, %s25, 0
        %s371 = smul.addr %s370, 8
        %s372 = scalar_lea.vmem %s8, %s371
        %p374 = scmp.eq.s32.totalorder %s26, 0
        // Predicated region
        $region65: #{lstm_model_forward.1} parent=51 // pred_check
          %p375 = pneg %p374
        $region66: #{lstm_model_forward.1} parent=51 // pred_check_branch
          %377 = sbr.rel (%p375) target = $region68
        $region67: #{lstm_model_forward.1} parent=51 // pred_region
          %378 = vst [vmem:[#allocation2] sm:$0xff] 0.0
          %379 = vst [vmem:[#allocation3] sm:$0xff] 0.0
          %380 = vst [vmem:[#allocation4] sm:$0xff] 0.0
          %381 = vst [vmem:[#allocation5] sm:$0xff] 0.0
        $region68: #{lstm_model_forward.1} parent=51 // pred_fallthru
          _
        %v382 = vld [vmem:[%s367] sm:$0xff]
        %v383 = vld [vmem:[%s367 + $0x8] sm:$0xff]
        %v384 = vld [vmem:[%s367 + $0x10] sm:$0xff]
        %v385 = vld [vmem:[%s367 + $0x18] sm:$0xff]
        %v386 = vpack.c.bf16 %v383, %v382
        %v387 = vpack.c.bf16 %v385, %v384
        %v388 = vld [vmem:[%s1] sm:$0xff]
        %v389 = vld [vmem:[%s1 + $0x8] sm:$0xff]
        %v390 = vld [vmem:[%s1 + $0x10] sm:$0xff]
        %v391 = vld [vmem:[%s1 + $0x18] sm:$0xff]
        %v396 = vunpack.c.l.b16 %v388
        %v397 = vunpack.c.h.b16 %v388
        %v398 = vunpack.c.l.b16 %v389
        %v399 = vunpack.c.h.b16 %v389
        %v400 = vunpack.c.l.b16 %v390
        %v401 = vunpack.c.h.b16 %v390
        %v402 = vunpack.c.l.b16 %v391
        %v403 = vunpack.c.h.b16 %v391
        %v404 = vpack.c.b16 %v400, %v396
        %v405 = vpack.c.b16 %v401, %v397
        %v406 = vpack.c.b16 %v402, %v398
        %v407 = vpack.c.b16 %v403, %v399
        %vm412 = vcmask 130048
        %v414 = vsel %vm412, %v386, 0
        %v417 = vsel %vm412, %v387, 0
        %419 = vmatprep.subr.bf16.mxu0 0
        %420 = vmatpush1.bf16.msra.mxu0 0
        %421 = vmatprep.subr.bf16.mxu0 0
        %422 = vmatpush1.bf16.msra.mxu0 0
        %423 = vmatprep.subr.bf16.mxu0 0
        %424 = vmatpush1.bf16.msra.mxu0 0
        %425 = vmatprep.subr.bf16.mxu0 0
        %426 = vmatpush1.bf16.msra.mxu0 0
        %427 = vmatprep.subr.bf16.mxu0 0
        %428 = vmatpush1.bf16.msra.mxu0 0
        %429 = vmatprep.subr.bf16.mxu0 0
        %430 = vmatpush1.bf16.msra.mxu0 0
        %431 = vmatprep.subr.bf16.mxu0 0
        %432 = vmatpush1.bf16.msra.mxu0 0
        %433 = vmatprep.subr.bf16.mxu0 %v405
        %434 = vmatpush1.bf16.msra.mxu0 %v404
        %435 = vmatprep.subr.bf16.mxu0 0
        %436 = vmatpush2.bf16.msra.mxu0 0
        %437 = vmatprep.subr.bf16.mxu0 0
        %438 = vmatpush2.bf16.msra.mxu0 0
        %439 = vmatprep.subr.bf16.mxu0 0
        %440 = vmatpush2.bf16.msra.mxu0 0
        %441 = vmatprep.subr.bf16.mxu0 0
        %442 = vmatpush2.bf16.msra.mxu0 0
        %443 = vmatprep.subr.bf16.mxu0 0
        %444 = vmatpush2.bf16.msra.mxu0 0
        %445 = vmatprep.subr.bf16.mxu0 0
        %446 = vmatpush2.bf16.msra.mxu0 0
        %447 = vmatprep.subr.bf16.mxu0 0
        %448 = vmatpush2.bf16.msra.mxu0 0
        %449 = vmatprep.subr.bf16.mxu0 0
        %450 = vmatpush2.bf16.msra.mxu0 0
        %451 = vmatprep.mubr.bf16.mxu0 0
        %452 = vmatmul.mubr.bf16.gmra.mxu0 %v414
        %v453 = vpop.f32.mrf.mxu0
        %v454 = vadd.f32 0.0, %v453
        %v455 = vpop.f32.mrf.mxu0
        %v456 = vadd.f32 0.0, %v455
        %v457 = vpop.f32.mrf.mxu0
        %v458 = vadd.f32 0.0, %v457
        %v459 = vpop.f32.mrf.mxu0
        %v460 = vadd.f32 0.0, %v459
        %461 = vmatprep.mubr.bf16.mxu0 0
        %462 = vmatmul.mubr.bf16.gmra.mxu0 %v417
        %v463 = vpop.f32.mrf.mxu0
        %v464 = vadd.f32 0.0, %v463
        %v465 = vpop.f32.mrf.mxu0
        %v466 = vadd.f32 0.0, %v465
        %v467 = vpop.f32.mrf.mxu0
        %v468 = vadd.f32 0.0, %v467
        %v469 = vpop.f32.mrf.mxu0
        %v470 = vadd.f32 0.0, %v469
        %471 = vdwg.mxu0
        %472 = vmatprep.subr.bf16.mxu0 0
        %473 = vmatpush1.bf16.msra.mxu0 0
        %474 = vmatprep.subr.bf16.mxu0 0
        %475 = vmatpush1.bf16.msra.mxu0 0
        %476 = vmatprep.subr.bf16.mxu0 0
        %477 = vmatpush1.bf16.msra.mxu0 0
        %478 = vmatprep.subr.bf16.mxu0 0
        %479 = vmatpush1.bf16.msra.mxu0 0
        %480 = vmatprep.subr.bf16.mxu0 0
        %481 = vmatpush1.bf16.msra.mxu0 0
        %482 = vmatprep.subr.bf16.mxu0 0
        %483 = vmatpush1.bf16.msra.mxu0 0
        %484 = vmatprep.subr.bf16.mxu0 0
        %485 = vmatpush1.bf16.msra.mxu0 0
        %486 = vmatprep.subr.bf16.mxu0 %v407
        %487 = vmatpush1.bf16.msra.mxu0 %v406
        %488 = vmatprep.subr.bf16.mxu0 0
        %489 = vmatpush2.bf16.msra.mxu0 0
        %490 = vmatprep.subr.bf16.mxu0 0
        %491 = vmatpush2.bf16.msra.mxu0 0
        %492 = vmatprep.subr.bf16.mxu0 0
        %493 = vmatpush2.bf16.msra.mxu0 0
        %494 = vmatprep.subr.bf16.mxu0 0
        %495 = vmatpush2.bf16.msra.mxu0 0
        %496 = vmatprep.subr.bf16.mxu0 0
        %497 = vmatpush2.bf16.msra.mxu0 0
        %498 = vmatprep.subr.bf16.mxu0 0
        %499 = vmatpush2.bf16.msra.mxu0 0
        %500 = vmatprep.subr.bf16.mxu0 0
        %501 = vmatpush2.bf16.msra.mxu0 0
        %502 = vmatprep.subr.bf16.mxu0 0
        %503 = vmatpush2.bf16.msra.mxu0 0
        %504 = vmatprep.mubr.bf16.mxu0 0
        %505 = vmatmul.mubr.bf16.gmra.mxu0 %v414
        %v506 = vpop.f32.mrf.mxu0
        %v507 = vadd.f32 0.0, %v506
        %v508 = vpop.f32.mrf.mxu0
        %v509 = vadd.f32 0.0, %v508
        %v510 = vpop.f32.mrf.mxu0
        %v511 = vadd.f32 0.0, %v510
        %v512 = vpop.f32.mrf.mxu0
        %v513 = vadd.f32 0.0, %v512
        %514 = vmatprep.mubr.bf16.mxu0 0
        %515 = vmatmul.mubr.bf16.gmra.mxu0 %v417
        %v516 = vpop.f32.mrf.mxu0
        %v517 = vadd.f32 0.0, %v516
        %v518 = vpop.f32.mrf.mxu0
        %v519 = vadd.f32 0.0, %v518
        %v520 = vpop.f32.mrf.mxu0
        %v521 = vadd.f32 0.0, %v520
        %v522 = vpop.f32.mrf.mxu0
        %v523 = vadd.f32 0.0, %v522
        %524 = vdwg.mxu0
        %v525 = vld [vmem:[%s3] sm:$0xf]
        %v526 = vld [vmem:[%s5] sm:$0xf]
        %v527 = vld [vmem:[#allocation2] sm:$0xff]
        %v528 = vld [vmem:[#allocation3] sm:$0xff]
        %v529 = vld [vmem:[#allocation4] sm:$0xff]
        %v530 = vld [vmem:[#allocation5] sm:$0xff]
        %v531 = vpack.c.bf16 %v527, %v527
        %v532 = vld [vmem:[#allocation6] sm:$0xff]
        %v533 = vld [vmem:[#allocation6 + $0x8] sm:$0xff]
        %v534 = vld [vmem:[#allocation6 + $0x10] sm:$0xff]
        %v535 = vld [vmem:[#allocation6 + $0x18] sm:$0xff]
        %v536 = vld [vmem:[#allocation6 + $0x20] sm:$0xff]
        %v537 = vld [vmem:[#allocation6 + $0x28] sm:$0xff]
        %v538 = vld [vmem:[#allocation6 + $0x30] sm:$0xff]
        %v539 = vld [vmem:[#allocation6 + $0x38] sm:$0xff]
        %v540 = vld [vmem:[#allocation6 + $0x40] sm:$0xff]
        %v541 = vld [vmem:[#allocation6 + $0x48] sm:$0xff]
        %v542 = vld [vmem:[#allocation6 + $0x50] sm:$0xff]
        %v543 = vld [vmem:[#allocation6 + $0x58] sm:$0xff]
        %v544 = vld [vmem:[#allocation6 + $0x60] sm:$0xff]
        %v545 = vld [vmem:[#allocation6 + $0x68] sm:$0xff]
        %v546 = vld [vmem:[#allocation6 + $0x70] sm:$0xff]
        %v547 = vld [vmem:[#allocation6 + $0x78] sm:$0xff]
        %v548 = vld [vmem:[#allocation6 + $0x80] sm:$0xff]
        %v549 = vld [vmem:[#allocation6 + $0x88] sm:$0xff]
        %v550 = vld [vmem:[#allocation6 + $0x90] sm:$0xff]
        %v551 = vld [vmem:[#allocation6 + $0x98] sm:$0xff]
        %v552 = vld [vmem:[#allocation6 + $0xa0] sm:$0xff]
        %v553 = vld [vmem:[#allocation6 + $0xa8] sm:$0xff]
        %v554 = vld [vmem:[#allocation6 + $0xb0] sm:$0xff]
        %v555 = vld [vmem:[#allocation6 + $0xb8] sm:$0xff]
        %v556 = vld [vmem:[#allocation6 + $0xc0] sm:$0xff]
        %v557 = vld [vmem:[#allocation6 + $0xc8] sm:$0xff]
        %v558 = vld [vmem:[#allocation6 + $0xd0] sm:$0xff]
        %v559 = vld [vmem:[#allocation6 + $0xd8] sm:$0xff]
        %v560 = vld [vmem:[#allocation6 + $0xe0] sm:$0xff]
        %v561 = vld [vmem:[#allocation6 + $0xe8] sm:$0xff]
        %v562 = vld [vmem:[#allocation6 + $0xf0] sm:$0xff]
        %v563 = vld [vmem:[#allocation6 + $0xf8] sm:$0xff]
        %v596 = vunpack.c.l.b16 %v532
        %v597 = vunpack.c.h.b16 %v532
        %v598 = vunpack.c.l.b16 %v533
        %v599 = vunpack.c.h.b16 %v533
        %v600 = vunpack.c.l.b16 %v534
        %v601 = vunpack.c.h.b16 %v534
        %v602 = vunpack.c.l.b16 %v535
        %v603 = vunpack.c.h.b16 %v535
        %v604 = vunpack.c.l.b16 %v536
        %v605 = vunpack.c.h.b16 %v536
        %v606 = vunpack.c.l.b16 %v537
        %v607 = vunpack.c.h.b16 %v537
        %v608 = vunpack.c.l.b16 %v538
        %v609 = vunpack.c.h.b16 %v538
        %v610 = vunpack.c.l.b16 %v539
        %v611 = vunpack.c.h.b16 %v539
        %v612 = vunpack.c.l.b16 %v540
        %v613 = vunpack.c.h.b16 %v540
        %v614 = vunpack.c.l.b16 %v541
        %v615 = vunpack.c.h.b16 %v541
        %v616 = vunpack.c.l.b16 %v542
        %v617 = vunpack.c.h.b16 %v542
        %v618 = vunpack.c.l.b16 %v543
        %v619 = vunpack.c.h.b16 %v543
        %v620 = vunpack.c.l.b16 %v544
        %v621 = vunpack.c.h.b16 %v544
        %v622 = vunpack.c.l.b16 %v545
        %v623 = vunpack.c.h.b16 %v545
        %v624 = vunpack.c.l.b16 %v546
        %v625 = vunpack.c.h.b16 %v546
        %v626 = vunpack.c.l.b16 %v547
        %v627 = vunpack.c.h.b16 %v547
        %v628 = vunpack.c.l.b16 %v548
        %v629 = vunpack.c.h.b16 %v548
        %v630 = vunpack.c.l.b16 %v549
        %v631 = vunpack.c.h.b16 %v549
        %v632 = vunpack.c.l.b16 %v550
        %v633 = vunpack.c.h.b16 %v550
        %v634 = vunpack.c.l.b16 %v551
        %v635 = vunpack.c.h.b16 %v551
        %v636 = vunpack.c.l.b16 %v552
        %v637 = vunpack.c.h.b16 %v552
        %v638 = vunpack.c.l.b16 %v553
        %v639 = vunpack.c.h.b16 %v553
        %v640 = vunpack.c.l.b16 %v554
        %v641 = vunpack.c.h.b16 %v554
        %v642 = vunpack.c.l.b16 %v555
        %v643 = vunpack.c.h.b16 %v555
        %v644 = vunpack.c.l.b16 %v556
        %v645 = vunpack.c.h.b16 %v556
        %v646 = vunpack.c.l.b16 %v557
        %v647 = vunpack.c.h.b16 %v557
        %v648 = vunpack.c.l.b16 %v558
        %v649 = vunpack.c.h.b16 %v558
        %v650 = vunpack.c.l.b16 %v559
        %v651 = vunpack.c.h.b16 %v559
        %v652 = vunpack.c.l.b16 %v560
        %v653 = vunpack.c.h.b16 %v560
        %v654 = vunpack.c.l.b16 %v561
        %v655 = vunpack.c.h.b16 %v561
        %v656 = vunpack.c.l.b16 %v562
        %v657 = vunpack.c.h.b16 %v562
        %v658 = vunpack.c.l.b16 %v563
        %v659 = vunpack.c.h.b16 %v563
        %v660 = vpack.c.b16 %v600, %v596
        %v661 = vpack.c.b16 %v601, %v597
        %v662 = vpack.c.b16 %v602, %v598
        %v663 = vpack.c.b16 %v603, %v599
        %v664 = vpack.c.b16 %v608, %v604
        %v665 = vpack.c.b16 %v609, %v605
        %v666 = vpack.c.b16 %v610, %v606
        %v667 = vpack.c.b16 %v611, %v607
        %v668 = vpack.c.b16 %v616, %v612
        %v669 = vpack.c.b16 %v617, %v613
        %v670 = vpack.c.b16 %v618, %v614
        %v671 = vpack.c.b16 %v619, %v615
        %v672 = vpack.c.b16 %v624, %v620
        %v673 = vpack.c.b16 %v625, %v621
        %v674 = vpack.c.b16 %v626, %v622
        %v675 = vpack.c.b16 %v627, %v623
        %v676 = vpack.c.b16 %v632, %v628
        %v677 = vpack.c.b16 %v633, %v629
        %v678 = vpack.c.b16 %v634, %v630
        %v679 = vpack.c.b16 %v635, %v631
        %v680 = vpack.c.b16 %v640, %v636
        %v681 = vpack.c.b16 %v641, %v637
        %v682 = vpack.c.b16 %v642, %v638
        %v683 = vpack.c.b16 %v643, %v639
        %v684 = vpack.c.b16 %v648, %v644
        %v685 = vpack.c.b16 %v649, %v645
        %v686 = vpack.c.b16 %v650, %v646
        %v687 = vpack.c.b16 %v651, %v647
        %v688 = vpack.c.b16 %v656, %v652
        %v689 = vpack.c.b16 %v657, %v653
        %v690 = vpack.c.b16 %v658, %v654
        %v691 = vpack.c.b16 %v659, %v655
        %724 = vmatprep.subr.bf16.mxu0 %v689
        %725 = vmatpush1.bf16.msra.mxu0 %v688
        %726 = vmatprep.subr.bf16.mxu0 %v685
        %727 = vmatpush1.bf16.msra.mxu0 %v684
        %728 = vmatprep.subr.bf16.mxu0 %v681
        %729 = vmatpush1.bf16.msra.mxu0 %v680
        %730 = vmatprep.subr.bf16.mxu0 %v677
        %731 = vmatpush1.bf16.msra.mxu0 %v676
        %732 = vmatprep.subr.bf16.mxu0 %v673
        %733 = vmatpush1.bf16.msra.mxu0 %v672
        %734 = vmatprep.subr.bf16.mxu0 %v669
        %735 = vmatpush1.bf16.msra.mxu0 %v668
        %736 = vmatprep.subr.bf16.mxu0 %v665
        %737 = vmatpush1.bf16.msra.mxu0 %v664
        %738 = vmatprep.subr.bf16.mxu0 %v661
        %739 = vmatpush1.bf16.msra.mxu0 %v660
        %740 = vmatprep.subr.bf16.mxu0 0
        %741 = vmatpush2.bf16.msra.mxu0 0
        %742 = vmatprep.subr.bf16.mxu0 0
        %743 = vmatpush2.bf16.msra.mxu0 0
        %744 = vmatprep.subr.bf16.mxu0 0
        %745 = vmatpush2.bf16.msra.mxu0 0
        %746 = vmatprep.subr.bf16.mxu0 0
        %747 = vmatpush2.bf16.msra.mxu0 0
        %748 = vmatprep.subr.bf16.mxu0 0
        %749 = vmatpush2.bf16.msra.mxu0 0
        %750 = vmatprep.subr.bf16.mxu0 0
        %751 = vmatpush2.bf16.msra.mxu0 0
        %752 = vmatprep.subr.bf16.mxu0 0
        %753 = vmatpush2.bf16.msra.mxu0 0
        %754 = vmatprep.subr.bf16.mxu0 0
        %755 = vmatpush2.bf16.msra.mxu0 0
        %756 = vmatprep.mubr.bf16.mxu0 0
        %757 = vmatmul.mubr.bf16.gmra.mxu0 %v531
        %v758 = vpop.f32.mrf.mxu0
        %v759 = vadd.f32 0.0, %v758
        %v760 = vpop.f32.mrf.mxu0
        %v761 = vadd.f32 0.0, %v760
        %v762 = vpop.f32.mrf.mxu0
        %v763 = vpop.f32.mrf.mxu0
        %764 = vdwg.mxu0
        %765 = vmatprep.subr.bf16.mxu0 %v691
        %766 = vmatpush1.bf16.msra.mxu0 %v690
        %767 = vmatprep.subr.bf16.mxu0 %v687
        %768 = vmatpush1.bf16.msra.mxu0 %v686
        %769 = vmatprep.subr.bf16.mxu0 %v683
        %770 = vmatpush1.bf16.msra.mxu0 %v682
        %771 = vmatprep.subr.bf16.mxu0 %v679
        %772 = vmatpush1.bf16.msra.mxu0 %v678
        %773 = vmatprep.subr.bf16.mxu0 %v675
        %774 = vmatpush1.bf16.msra.mxu0 %v674
        %775 = vmatprep.subr.bf16.mxu0 %v671
        %776 = vmatpush1.bf16.msra.mxu0 %v670
        %777 = vmatprep.subr.bf16.mxu0 %v667
        %778 = vmatpush1.bf16.msra.mxu0 %v666
        %779 = vmatprep.subr.bf16.mxu0 %v663
        %780 = vmatpush1.bf16.msra.mxu0 %v662
        %781 = vmatprep.subr.bf16.mxu0 0
        %782 = vmatpush2.bf16.msra.mxu0 0
        %783 = vmatprep.subr.bf16.mxu0 0
        %784 = vmatpush2.bf16.msra.mxu0 0
        %785 = vmatprep.subr.bf16.mxu0 0
        %786 = vmatpush2.bf16.msra.mxu0 0
        %787 = vmatprep.subr.bf16.mxu0 0
        %788 = vmatpush2.bf16.msra.mxu0 0
        %789 = vmatprep.subr.bf16.mxu0 0
        %790 = vmatpush2.bf16.msra.mxu0 0
        %791 = vmatprep.subr.bf16.mxu0 0
        %792 = vmatpush2.bf16.msra.mxu0 0
        %793 = vmatprep.subr.bf16.mxu0 0
        %794 = vmatpush2.bf16.msra.mxu0 0
        %795 = vmatprep.subr.bf16.mxu0 0
        %796 = vmatpush2.bf16.msra.mxu0 0
        %797 = vmatprep.mubr.bf16.mxu0 0
        %798 = vmatmul.mubr.bf16.gmra.mxu0 %v531
        %v799 = vpop.f32.mrf.mxu0
        %v800 = vadd.f32 0.0, %v799
        %v801 = vpop.f32.mrf.mxu0
        %v802 = vadd.f32 0.0, %v801
        %v803 = vpop.f32.mrf.mxu0
        %v804 = vpop.f32.mrf.mxu0
        %805 = vdwg.mxu0
        %v806 = vadd.f32 %v454, %v759
        %v807 = vadd.f32 %v456, %v761
        %v808 = vadd.f32 %v507, %v800
        %v809 = vadd.f32 %v509, %v802
        %v811 = vlaneseq
        %v812 = vshrl.u32 %v811, 7
        %v813 = vsub.s32 0, %v812
        %v814 = vrot.slane %v525, %v813
        %v815 = vlaneseq
        %v816 = vshrl.u32 %v815, 7
        %v817 = vsub.s32 1, %v816
        %v818 = vrot.slane %v525, %v817
        %v819 = vlaneseq
        %v820 = vshrl.u32 %v819, 7
        %v821 = vsub.s32 2, %v820
        %v822 = vrot.slane %v525, %v821
        %v823 = vlaneseq
        %v824 = vshrl.u32 %v823, 7
        %v825 = vsub.s32 3, %v824
        %v826 = vrot.slane %v525, %v825
        %v831 = vadd.f32 %v806, %v814
        %v832 = vadd.f32 %v807, %v818
        %v833 = vadd.f32 %v808, %v822
        %v834 = vadd.f32 %v809, %v826
        %v835 = vxor.u32 %v831, 2147483648
        %v836 = vmul.f32 %v835, 1.442695
        %v837 = vpow.pop %v836
        %v838 = vadd.f32 %v837, 1.0
        %v839 = vrcp.pop %v838
        %v840 = vmul.f32 1.0, %v839
        %v841 = vxor.u32 %v832, 2147483648
        %v842 = vmul.f32 %v841, 1.442695
        %v843 = vpow.pop %v842
        %v844 = vadd.f32 %v843, 1.0
        %v845 = vrcp.pop %v844
        %v846 = vmul.f32 1.0, %v845
        %v847 = vtanh.pop %v833
        %v848 = vxor.u32 %v834, 2147483648
        %v849 = vmul.f32 %v848, 1.442695
        %v850 = vpow.pop %v849
        %v851 = vadd.f32 %v850, 1.0
        %v852 = vrcp.pop %v851
        %v853 = vmul.f32 1.0, %v852
        %v854 = vmul.f32 %v846, %v528
        %v855 = vmul.f32 %v840, %v847
        %v856 = vadd.f32 %v854, %v855
        %v857 = vtanh.pop %v856
        %v858 = vmul.f32 %v853, %v857
        %v859 = vpack.c.bf16 %v858, %v858
        %v860 = vpack.c.bf16 %v529, %v529
        %v861 = vld [vmem:[#allocation8] sm:$0xff]
        %v862 = vld [vmem:[#allocation8 + $0x8] sm:$0xff]
        %v863 = vld [vmem:[#allocation8 + $0x10] sm:$0xff]
        %v864 = vld [vmem:[#allocation8 + $0x18] sm:$0xff]
        %v865 = vld [vmem:[#allocation8 + $0x20] sm:$0xff]
        %v866 = vld [vmem:[#allocation8 + $0x28] sm:$0xff]
        %v867 = vld [vmem:[#allocation8 + $0x30] sm:$0xff]
        %v868 = vld [vmem:[#allocation8 + $0x38] sm:$0xff]
        %v869 = vld [vmem:[#allocation8 + $0x40] sm:$0xff]
        %v870 = vld [vmem:[#allocation8 + $0x48] sm:$0xff]
        %v871 = vld [vmem:[#allocation8 + $0x50] sm:$0xff]
        %v872 = vld [vmem:[#allocation8 + $0x58] sm:$0xff]
        %v873 = vld [vmem:[#allocation8 + $0x60] sm:$0xff]
        %v874 = vld [vmem:[#allocation8 + $0x68] sm:$0xff]
        %v875 = vld [vmem:[#allocation8 + $0x70] sm:$0xff]
        %v876 = vld [vmem:[#allocation8 + $0x78] sm:$0xff]
        %v877 = vld [vmem:[#allocation8 + $0x80] sm:$0xff]
        %v878 = vld [vmem:[#allocation8 + $0x88] sm:$0xff]
        %v879 = vld [vmem:[#allocation8 + $0x90] sm:$0xff]
        %v880 = vld [vmem:[#allocation8 + $0x98] sm:$0xff]
        %v881 = vld [vmem:[#allocation8 + $0xa0] sm:$0xff]
        %v882 = vld [vmem:[#allocation8 + $0xa8] sm:$0xff]
        %v883 = vld [vmem:[#allocation8 + $0xb0] sm:$0xff]
        %v884 = vld [vmem:[#allocation8 + $0xb8] sm:$0xff]
        %v885 = vld [vmem:[#allocation8 + $0xc0] sm:$0xff]
        %v886 = vld [vmem:[#allocation8 + $0xc8] sm:$0xff]
        %v887 = vld [vmem:[#allocation8 + $0xd0] sm:$0xff]
        %v888 = vld [vmem:[#allocation8 + $0xd8] sm:$0xff]
        %v889 = vld [vmem:[#allocation8 + $0xe0] sm:$0xff]
        %v890 = vld [vmem:[#allocation8 + $0xe8] sm:$0xff]
        %v891 = vld [vmem:[#allocation8 + $0xf0] sm:$0xff]
        %v892 = vld [vmem:[#allocation8 + $0xf8] sm:$0xff]
        %v893 = vld [vmem:[#allocation8 + $0x100] sm:$0xff]
        %v894 = vld [vmem:[#allocation8 + $0x108] sm:$0xff]
        %v895 = vld [vmem:[#allocation8 + $0x110] sm:$0xff]
        %v896 = vld [vmem:[#allocation8 + $0x118] sm:$0xff]
        %v897 = vld [vmem:[#allocation8 + $0x120] sm:$0xff]
        %v898 = vld [vmem:[#allocation8 + $0x128] sm:$0xff]
        %v899 = vld [vmem:[#allocation8 + $0x130] sm:$0xff]
        %v900 = vld [vmem:[#allocation8 + $0x138] sm:$0xff]
        %v901 = vld [vmem:[#allocation8 + $0x140] sm:$0xff]
        %v902 = vld [vmem:[#allocation8 + $0x148] sm:$0xff]
        %v903 = vld [vmem:[#allocation8 + $0x150] sm:$0xff]
        %v904 = vld [vmem:[#allocation8 + $0x158] sm:$0xff]
        %v905 = vld [vmem:[#allocation8 + $0x160] sm:$0xff]
        %v906 = vld [vmem:[#allocation8 + $0x168] sm:$0xff]
        %v907 = vld [vmem:[#allocation8 + $0x170] sm:$0xff]
        %v908 = vld [vmem:[#allocation8 + $0x178] sm:$0xff]
        %v909 = vld [vmem:[#allocation8 + $0x180] sm:$0xff]
        %v910 = vld [vmem:[#allocation8 + $0x188] sm:$0xff]
        %v911 = vld [vmem:[#allocation8 + $0x190] sm:$0xff]
        %v912 = vld [vmem:[#allocation8 + $0x198] sm:$0xff]
        %v913 = vld [vmem:[#allocation8 + $0x1a0] sm:$0xff]
        %v914 = vld [vmem:[#allocation8 + $0x1a8] sm:$0xff]
        %v915 = vld [vmem:[#allocation8 + $0x1b0] sm:$0xff]
        %v916 = vld [vmem:[#allocation8 + $0x1b8] sm:$0xff]
        %v917 = vld [vmem:[#allocation8 + $0x1c0] sm:$0xff]
        %v918 = vld [vmem:[#allocation8 + $0x1c8] sm:$0xff]
        %v919 = vld [vmem:[#allocation8 + $0x1d0] sm:$0xff]
        %v920 = vld [vmem:[#allocation8 + $0x1d8] sm:$0xff]
        %v921 = vld [vmem:[#allocation8 + $0x1e0] sm:$0xff]
        %v922 = vld [vmem:[#allocation8 + $0x1e8] sm:$0xff]
        %v923 = vld [vmem:[#allocation8 + $0x1f0] sm:$0xff]
        %v924 = vld [vmem:[#allocation8 + $0x1f8] sm:$0xff]
        %v926 = vlaneseq
        %v927 = vshrl.u32 %v926, 7
        %v928 = vsub.s32 0, %v927
        %v929 = vrot.slane %v526, %v928
        %v930 = vlaneseq
        %v931 = vshrl.u32 %v930, 7
        %v932 = vsub.s32 1, %v931
        %v933 = vrot.slane %v526, %v932
        %v934 = vlaneseq
        %v935 = vshrl.u32 %v934, 7
        %v936 = vsub.s32 2, %v935
        %v937 = vrot.slane %v526, %v936
        %v938 = vlaneseq
        %v939 = vshrl.u32 %v938, 7
        %v940 = vsub.s32 3, %v939
        %v941 = vrot.slane %v526, %v940
        %v1010 = vunpack.c.l.b16 %v861
        %v1011 = vunpack.c.h.b16 %v861
        %v1012 = vunpack.c.l.b16 %v862
        %v1013 = vunpack.c.h.b16 %v862
        %v1014 = vunpack.c.l.b16 %v863
        %v1015 = vunpack.c.h.b16 %v863
        %v1016 = vunpack.c.l.b16 %v864
        %v1017 = vunpack.c.h.b16 %v864
        %v1018 = vunpack.c.l.b16 %v865
        %v1019 = vunpack.c.h.b16 %v865
        %v1020 = vunpack.c.l.b16 %v866
        %v1021 = vunpack.c.h.b16 %v866
        %v1022 = vunpack.c.l.b16 %v867
        %v1023 = vunpack.c.h.b16 %v867
        %v1024 = vunpack.c.l.b16 %v868
        %v1025 = vunpack.c.h.b16 %v868
        %v1026 = vunpack.c.l.b16 %v869
        %v1027 = vunpack.c.h.b16 %v869
        %v1028 = vunpack.c.l.b16 %v870
        %v1029 = vunpack.c.h.b16 %v870
        %v1030 = vunpack.c.l.b16 %v871
        %v1031 = vunpack.c.h.b16 %v871
        %v1032 = vunpack.c.l.b16 %v872
        %v1033 = vunpack.c.h.b16 %v872
        %v1034 = vunpack.c.l.b16 %v873
        %v1035 = vunpack.c.h.b16 %v873
        %v1036 = vunpack.c.l.b16 %v874
        %v1037 = vunpack.c.h.b16 %v874
        %v1038 = vunpack.c.l.b16 %v875
        %v1039 = vunpack.c.h.b16 %v875
        %v1040 = vunpack.c.l.b16 %v876
        %v1041 = vunpack.c.h.b16 %v876
        %v1042 = vunpack.c.l.b16 %v877
        %v1043 = vunpack.c.h.b16 %v877
        %v1044 = vunpack.c.l.b16 %v878
        %v1045 = vunpack.c.h.b16 %v878
        %v1046 = vunpack.c.l.b16 %v879
        %v1047 = vunpack.c.h.b16 %v879
        %v1048 = vunpack.c.l.b16 %v880
        %v1049 = vunpack.c.h.b16 %v880
        %v1050 = vunpack.c.l.b16 %v881
        %v1051 = vunpack.c.h.b16 %v881
        %v1052 = vunpack.c.l.b16 %v882
        %v1053 = vunpack.c.h.b16 %v882
        %v1054 = vunpack.c.l.b16 %v883
        %v1055 = vunpack.c.h.b16 %v883
        %v1056 = vunpack.c.l.b16 %v884
        %v1057 = vunpack.c.h.b16 %v884
        %v1058 = vunpack.c.l.b16 %v885
        %v1059 = vunpack.c.h.b16 %v885
        %v1060 = vunpack.c.l.b16 %v886
        %v1061 = vunpack.c.h.b16 %v886
        %v1062 = vunpack.c.l.b16 %v887
        %v1063 = vunpack.c.h.b16 %v887
        %v1064 = vunpack.c.l.b16 %v888
        %v1065 = vunpack.c.h.b16 %v888
        %v1066 = vunpack.c.l.b16 %v889
        %v1067 = vunpack.c.h.b16 %v889
        %v1068 = vunpack.c.l.b16 %v890
        %v1069 = vunpack.c.h.b16 %v890
        %v1070 = vunpack.c.l.b16 %v891
        %v1071 = vunpack.c.h.b16 %v891
        %v1072 = vunpack.c.l.b16 %v892
        %v1073 = vunpack.c.h.b16 %v892
        %v1074 = vunpack.c.l.b16 %v893
        %v1075 = vunpack.c.h.b16 %v893
        %v1076 = vunpack.c.l.b16 %v894
        %v1077 = vunpack.c.h.b16 %v894
        %v1078 = vunpack.c.l.b16 %v895
        %v1079 = vunpack.c.h.b16 %v895
        %v1080 = vunpack.c.l.b16 %v896
        %v1081 = vunpack.c.h.b16 %v896
        %v1082 = vunpack.c.l.b16 %v897
        %v1083 = vunpack.c.h.b16 %v897
        %v1084 = vunpack.c.l.b16 %v898
        %v1085 = vunpack.c.h.b16 %v898
        %v1086 = vunpack.c.l.b16 %v899
        %v1087 = vunpack.c.h.b16 %v899
        %v1088 = vunpack.c.l.b16 %v900
        %v1089 = vunpack.c.h.b16 %v900
        %v1090 = vunpack.c.l.b16 %v901
        %v1091 = vunpack.c.h.b16 %v901
        %v1092 = vunpack.c.l.b16 %v902
        %v1093 = vunpack.c.h.b16 %v902
        %v1094 = vunpack.c.l.b16 %v903
        %v1095 = vunpack.c.h.b16 %v903
        %v1096 = vunpack.c.l.b16 %v904
        %v1097 = vunpack.c.h.b16 %v904
        %v1098 = vunpack.c.l.b16 %v905
        %v1099 = vunpack.c.h.b16 %v905
        %v1100 = vunpack.c.l.b16 %v906
        %v1101 = vunpack.c.h.b16 %v906
        %v1102 = vunpack.c.l.b16 %v907
        %v1103 = vunpack.c.h.b16 %v907
        %v1104 = vunpack.c.l.b16 %v908
        %v1105 = vunpack.c.h.b16 %v908
        %v1106 = vunpack.c.l.b16 %v909
        %v1107 = vunpack.c.h.b16 %v909
        %v1108 = vunpack.c.l.b16 %v910
        %v1109 = vunpack.c.h.b16 %v910
        %v1110 = vunpack.c.l.b16 %v911
        %v1111 = vunpack.c.h.b16 %v911
        %v1112 = vunpack.c.l.b16 %v912
        %v1113 = vunpack.c.h.b16 %v912
        %v1114 = vunpack.c.l.b16 %v913
        %v1115 = vunpack.c.h.b16 %v913
        %v1116 = vunpack.c.l.b16 %v914
        %v1117 = vunpack.c.h.b16 %v914
        %v1118 = vunpack.c.l.b16 %v915
        %v1119 = vunpack.c.h.b16 %v915
        %v1120 = vunpack.c.l.b16 %v916
        %v1121 = vunpack.c.h.b16 %v916
        %v1122 = vunpack.c.l.b16 %v917
        %v1123 = vunpack.c.h.b16 %v917
        %v1124 = vunpack.c.l.b16 %v918
        %v1125 = vunpack.c.h.b16 %v918
        %v1126 = vunpack.c.l.b16 %v919
        %v1127 = vunpack.c.h.b16 %v919
        %v1128 = vunpack.c.l.b16 %v920
        %v1129 = vunpack.c.h.b16 %v920
        %v1130 = vunpack.c.l.b16 %v921
        %v1131 = vunpack.c.h.b16 %v921
        %v1132 = vunpack.c.l.b16 %v922
        %v1133 = vunpack.c.h.b16 %v922
        %v1134 = vunpack.c.l.b16 %v923
        %v1135 = vunpack.c.h.b16 %v923
        %v1136 = vunpack.c.l.b16 %v924
        %v1137 = vunpack.c.h.b16 %v924
        %v1138 = vpack.c.b16 %v1014, %v1010
        %v1139 = vpack.c.b16 %v1015, %v1011
        %v1140 = vpack.c.b16 %v1016, %v1012
        %v1141 = vpack.c.b16 %v1017, %v1013
        %v1142 = vpack.c.b16 %v1022, %v1018
        %v1143 = vpack.c.b16 %v1023, %v1019
        %v1144 = vpack.c.b16 %v1024, %v1020
        %v1145 = vpack.c.b16 %v1025, %v1021
        %v1146 = vpack.c.b16 %v1030, %v1026
        %v1147 = vpack.c.b16 %v1031, %v1027
        %v1148 = vpack.c.b16 %v1032, %v1028
        %v1149 = vpack.c.b16 %v1033, %v1029
        %v1150 = vpack.c.b16 %v1038, %v1034
        %v1151 = vpack.c.b16 %v1039, %v1035
        %v1152 = vpack.c.b16 %v1040, %v1036
        %v1153 = vpack.c.b16 %v1041, %v1037
        %v1154 = vpack.c.b16 %v1046, %v1042
        %v1155 = vpack.c.b16 %v1047, %v1043
        %v1156 = vpack.c.b16 %v1048, %v1044
        %v1157 = vpack.c.b16 %v1049, %v1045
        %v1158 = vpack.c.b16 %v1054, %v1050
        %v1159 = vpack.c.b16 %v1055, %v1051
        %v1160 = vpack.c.b16 %v1056, %v1052
        %v1161 = vpack.c.b16 %v1057, %v1053
        %v1162 = vpack.c.b16 %v1062, %v1058
        %v1163 = vpack.c.b16 %v1063, %v1059
        %v1164 = vpack.c.b16 %v1064, %v1060
        %v1165 = vpack.c.b16 %v1065, %v1061
        %v1166 = vpack.c.b16 %v1070, %v1066
        %v1167 = vpack.c.b16 %v1071, %v1067
        %v1168 = vpack.c.b16 %v1072, %v1068
        %v1169 = vpack.c.b16 %v1073, %v1069
        %v1170 = vpack.c.b16 %v1078, %v1074
        %v1171 = vpack.c.b16 %v1079, %v1075
        %v1172 = vpack.c.b16 %v1080, %v1076
        %v1173 = vpack.c.b16 %v1081, %v1077
        %v1174 = vpack.c.b16 %v1086, %v1082
        %v1175 = vpack.c.b16 %v1087, %v1083
        %v1176 = vpack.c.b16 %v1088, %v1084
        %v1177 = vpack.c.b16 %v1089, %v1085
        %v1178 = vpack.c.b16 %v1094, %v1090
        %v1179 = vpack.c.b16 %v1095, %v1091
        %v1180 = vpack.c.b16 %v1096, %v1092
        %v1181 = vpack.c.b16 %v1097, %v1093
        %v1182 = vpack.c.b16 %v1102, %v1098
        %v1183 = vpack.c.b16 %v1103, %v1099
        %v1184 = vpack.c.b16 %v1104, %v1100
        %v1185 = vpack.c.b16 %v1105, %v1101
        %v1186 = vpack.c.b16 %v1110, %v1106
        %v1187 = vpack.c.b16 %v1111, %v1107
        %v1188 = vpack.c.b16 %v1112, %v1108
        %v1189 = vpack.c.b16 %v1113, %v1109
        %v1190 = vpack.c.b16 %v1118, %v1114
        %v1191 = vpack.c.b16 %v1119, %v1115
        %v1192 = vpack.c.b16 %v1120, %v1116
        %v1193 = vpack.c.b16 %v1121, %v1117
        %v1194 = vpack.c.b16 %v1126, %v1122
        %v1195 = vpack.c.b16 %v1127, %v1123
        %v1196 = vpack.c.b16 %v1128, %v1124
        %v1197 = vpack.c.b16 %v1129, %v1125
        %v1198 = vpack.c.b16 %v1134, %v1130
        %v1199 = vpack.c.b16 %v1135, %v1131
        %v1200 = vpack.c.b16 %v1136, %v1132
        %v1201 = vpack.c.b16 %v1137, %v1133
        %1266 = vmatprep.subr.bf16.mxu0 %v1167
        %1267 = vmatpush1.bf16.msra.mxu0 %v1166
        %1268 = vmatprep.subr.bf16.mxu0 %v1163
        %1269 = vmatpush1.bf16.msra.mxu0 %v1162
        %1270 = vmatprep.subr.bf16.mxu0 %v1159
        %1271 = vmatpush1.bf16.msra.mxu0 %v1158
        %1272 = vmatprep.subr.bf16.mxu0 %v1155
        %1273 = vmatpush1.bf16.msra.mxu0 %v1154
        %1274 = vmatprep.subr.bf16.mxu0 %v1151
        %1275 = vmatpush1.bf16.msra.mxu0 %v1150
        %1276 = vmatprep.subr.bf16.mxu0 %v1147
        %1277 = vmatpush1.bf16.msra.mxu0 %v1146
        %1278 = vmatprep.subr.bf16.mxu0 %v1143
        %1279 = vmatpush1.bf16.msra.mxu0 %v1142
        %1280 = vmatprep.subr.bf16.mxu0 %v1139
        %1281 = vmatpush1.bf16.msra.mxu0 %v1138
        %1282 = vmatprep.subr.bf16.mxu0 %v1199
        %1283 = vmatpush2.bf16.msra.mxu0 %v1198
        %1284 = vmatprep.subr.bf16.mxu0 %v1195
        %1285 = vmatpush2.bf16.msra.mxu0 %v1194
        %1286 = vmatprep.subr.bf16.mxu0 %v1191
        %1287 = vmatpush2.bf16.msra.mxu0 %v1190
        %1288 = vmatprep.subr.bf16.mxu0 %v1187
        %1289 = vmatpush2.bf16.msra.mxu0 %v1186
        %1290 = vmatprep.subr.bf16.mxu0 %v1183
        %1291 = vmatpush2.bf16.msra.mxu0 %v1182
        %1292 = vmatprep.subr.bf16.mxu0 %v1179
        %1293 = vmatpush2.bf16.msra.mxu0 %v1178
        %1294 = vmatprep.subr.bf16.mxu0 %v1175
        %1295 = vmatpush2.bf16.msra.mxu0 %v1174
        %1296 = vmatprep.subr.bf16.mxu0 %v1171
        %1297 = vmatpush2.bf16.msra.mxu0 %v1170
        %1298 = vmatprep.mubr.bf16.mxu0 %v860
        %1299 = vmatmul.mubr.bf16.gmra.mxu0 %v859
        %v1300 = vpop.f32.mrf.mxu0
        %v1301 = vadd.f32 %v929, %v1300
        %v1302 = vpop.f32.mrf.mxu0
        %v1303 = vadd.f32 %v933, %v1302
        %v1304 = vpop.f32.mrf.mxu0
        %v1305 = vpop.f32.mrf.mxu0
        %1306 = vdwg.mxu0
        %1307 = vmatprep.subr.bf16.mxu0 %v1169
        %1308 = vmatpush1.bf16.msra.mxu0 %v1168
        %1309 = vmatprep.subr.bf16.mxu0 %v1165
        %1310 = vmatpush1.bf16.msra.mxu0 %v1164
        %1311 = vmatprep.subr.bf16.mxu0 %v1161
        %1312 = vmatpush1.bf16.msra.mxu0 %v1160
        %1313 = vmatprep.subr.bf16.mxu0 %v1157
        %1314 = vmatpush1.bf16.msra.mxu0 %v1156
        %1315 = vmatprep.subr.bf16.mxu0 %v1153
        %1316 = vmatpush1.bf16.msra.mxu0 %v1152
        %1317 = vmatprep.subr.bf16.mxu0 %v1149
        %1318 = vmatpush1.bf16.msra.mxu0 %v1148
        %1319 = vmatprep.subr.bf16.mxu0 %v1145
        %1320 = vmatpush1.bf16.msra.mxu0 %v1144
        %1321 = vmatprep.subr.bf16.mxu0 %v1141
        %1322 = vmatpush1.bf16.msra.mxu0 %v1140
        %1323 = vmatprep.subr.bf16.mxu0 %v1201
        %1324 = vmatpush2.bf16.msra.mxu0 %v1200
        %1325 = vmatprep.subr.bf16.mxu0 %v1197
        %1326 = vmatpush2.bf16.msra.mxu0 %v1196
        %1327 = vmatprep.subr.bf16.mxu0 %v1193
        %1328 = vmatpush2.bf16.msra.mxu0 %v1192
        %1329 = vmatprep.subr.bf16.mxu0 %v1189
        %1330 = vmatpush2.bf16.msra.mxu0 %v1188
        %1331 = vmatprep.subr.bf16.mxu0 %v1185
        %1332 = vmatpush2.bf16.msra.mxu0 %v1184
        %1333 = vmatprep.subr.bf16.mxu0 %v1181
        %1334 = vmatpush2.bf16.msra.mxu0 %v1180
        %1335 = vmatprep.subr.bf16.mxu0 %v1177
        %1336 = vmatpush2.bf16.msra.mxu0 %v1176
        %1337 = vmatprep.subr.bf16.mxu0 %v1173
        %1338 = vmatpush2.bf16.msra.mxu0 %v1172
        %1339 = vmatprep.mubr.bf16.mxu0 %v860
        %1340 = vmatmul.mubr.bf16.gmra.mxu0 %v859
        %v1341 = vpop.f32.mrf.mxu0
        %v1342 = vadd.f32 %v937, %v1341
        %v1343 = vpop.f32.mrf.mxu0
        %v1344 = vadd.f32 %v941, %v1343
        %v1345 = vpop.f32.mrf.mxu0
        %v1346 = vpop.f32.mrf.mxu0
        %1347 = vdwg.mxu0
        %v1348 = vxor.u32 %v1301, 2147483648
        %v1349 = vmul.f32 %v1348, 1.442695
        %v1350 = vpow.pop %v1349
        %v1351 = vadd.f32 %v1350, 1.0
        %v1352 = vrcp.pop %v1351
        %v1353 = vmul.f32 1.0, %v1352
        %v1354 = vxor.u32 %v1303, 2147483648
        %v1355 = vmul.f32 %v1354, 1.442695
        %v1356 = vpow.pop %v1355
        %v1357 = vadd.f32 %v1356, 1.0
        %v1358 = vrcp.pop %v1357
        %v1359 = vmul.f32 1.0, %v1358
        %v1360 = vtanh.pop %v1342
        %v1361 = vxor.u32 %v1344, 2147483648
        %v1362 = vmul.f32 %v1361, 1.442695
        %v1363 = vpow.pop %v1362
        %v1364 = vadd.f32 %v1363, 1.0
        %v1365 = vrcp.pop %v1364
        %v1366 = vmul.f32 1.0, %v1365
        %v1367 = vmul.f32 %v1359, %v530
        %v1368 = vmul.f32 %v1353, %v1360
        %v1369 = vadd.f32 %v1367, %v1368
        %v1370 = vtanh.pop %v1369
        %v1371 = vmul.f32 %v1366, %v1370
        %1372 = vmatprep.subr.bf16.mxu0 %v689
        %1373 = vmatpush1.bf16.msra.mxu0 %v688
        %1374 = vmatprep.subr.bf16.mxu0 %v685
        %1375 = vmatpush1.bf16.msra.mxu0 %v684
        %1376 = vmatprep.subr.bf16.mxu0 %v681
        %1377 = vmatpush1.bf16.msra.mxu0 %v680
        %1378 = vmatprep.subr.bf16.mxu0 %v677
        %1379 = vmatpush1.bf16.msra.mxu0 %v676
        %1380 = vmatprep.subr.bf16.mxu0 %v673
        %1381 = vmatpush1.bf16.msra.mxu0 %v672
        %1382 = vmatprep.subr.bf16.mxu0 %v669
        %1383 = vmatpush1.bf16.msra.mxu0 %v668
        %1384 = vmatprep.subr.bf16.mxu0 %v665
        %1385 = vmatpush1.bf16.msra.mxu0 %v664
        %1386 = vmatprep.subr.bf16.mxu0 %v661
        %1387 = vmatpush1.bf16.msra.mxu0 %v660
        %1388 = vmatprep.subr.bf16.mxu0 0
        %1389 = vmatpush2.bf16.msra.mxu0 0
        %1390 = vmatprep.subr.bf16.mxu0 0
        %1391 = vmatpush2.bf16.msra.mxu0 0
        %1392 = vmatprep.subr.bf16.mxu0 0
        %1393 = vmatpush2.bf16.msra.mxu0 0
        %1394 = vmatprep.subr.bf16.mxu0 0
        %1395 = vmatpush2.bf16.msra.mxu0 0
        %1396 = vmatprep.subr.bf16.mxu0 0
        %1397 = vmatpush2.bf16.msra.mxu0 0
        %1398 = vmatprep.subr.bf16.mxu0 0
        %1399 = vmatpush2.bf16.msra.mxu0 0
        %1400 = vmatprep.subr.bf16.mxu0 0
        %1401 = vmatpush2.bf16.msra.mxu0 0
        %1402 = vmatprep.subr.bf16.mxu0 0
        %1403 = vmatpush2.bf16.msra.mxu0 0
        %1404 = vmatprep.mubr.bf16.mxu0 0
        %1405 = vmatmul.mubr.bf16.gmra.mxu0 %v859
        %v1406 = vpop.f32.mrf.mxu0
        %v1407 = vadd.f32 0.0, %v1406
        %v1408 = vpop.f32.mrf.mxu0
        %v1409 = vadd.f32 0.0, %v1408
        %v1410 = vpop.f32.mrf.mxu0
        %v1411 = vpop.f32.mrf.mxu0
        %1412 = vdwg.mxu0
        %1413 = vmatprep.subr.bf16.mxu0 %v691
        %1414 = vmatpush1.bf16.msra.mxu0 %v690
        %1415 = vmatprep.subr.bf16.mxu0 %v687
        %1416 = vmatpush1.bf16.msra.mxu0 %v686
        %1417 = vmatprep.subr.bf16.mxu0 %v683
        %1418 = vmatpush1.bf16.msra.mxu0 %v682
        %1419 = vmatprep.subr.bf16.mxu0 %v679
        %1420 = vmatpush1.bf16.msra.mxu0 %v678
        %1421 = vmatprep.subr.bf16.mxu0 %v675
        %1422 = vmatpush1.bf16.msra.mxu0 %v674
        %1423 = vmatprep.subr.bf16.mxu0 %v671
        %1424 = vmatpush1.bf16.msra.mxu0 %v670
        %1425 = vmatprep.subr.bf16.mxu0 %v667
        %1426 = vmatpush1.bf16.msra.mxu0 %v666
        %1427 = vmatprep.subr.bf16.mxu0 %v663
        %1428 = vmatpush1.bf16.msra.mxu0 %v662
        %1429 = vmatprep.subr.bf16.mxu0 0
        %1430 = vmatpush2.bf16.msra.mxu0 0
        %1431 = vmatprep.subr.bf16.mxu0 0
        %1432 = vmatpush2.bf16.msra.mxu0 0
        %1433 = vmatprep.subr.bf16.mxu0 0
        %1434 = vmatpush2.bf16.msra.mxu0 0
        %1435 = vmatprep.subr.bf16.mxu0 0
        %1436 = vmatpush2.bf16.msra.mxu0 0
        %1437 = vmatprep.subr.bf16.mxu0 0
        %1438 = vmatpush2.bf16.msra.mxu0 0
        %1439 = vmatprep.subr.bf16.mxu0 0
        %1440 = vmatpush2.bf16.msra.mxu0 0
        %1441 = vmatprep.subr.bf16.mxu0 0
        %1442 = vmatpush2.bf16.msra.mxu0 0
        %1443 = vmatprep.subr.bf16.mxu0 0
        %1444 = vmatpush2.bf16.msra.mxu0 0
        %1445 = vmatprep.mubr.bf16.mxu0 0
        %1446 = vmatmul.mubr.bf16.gmra.mxu0 %v859
        %v1447 = vpop.f32.mrf.mxu0
        %v1448 = vadd.f32 0.0, %v1447
        %v1449 = vpop.f32.mrf.mxu0
        %v1450 = vadd.f32 0.0, %v1449
        %v1451 = vpop.f32.mrf.mxu0
        %v1452 = vpop.f32.mrf.mxu0
        %1453 = vdwg.mxu0
        %v1454 = vadd.f32 %v458, %v1407
        %v1455 = vadd.f32 %v460, %v1409
        %v1456 = vadd.f32 %v511, %v1448
        %v1457 = vadd.f32 %v513, %v1450
        %v1458 = vadd.f32 %v1454, %v814
        %v1459 = vadd.f32 %v1455, %v818
        %v1460 = vadd.f32 %v1456, %v822
        %v1461 = vadd.f32 %v1457, %v826
        %v1462 = vxor.u32 %v1458, 2147483648
        %v1463 = vmul.f32 %v1462, 1.442695
        %v1464 = vpow.pop %v1463
        %v1465 = vadd.f32 %v1464, 1.0
        %v1466 = vrcp.pop %v1465
        %v1467 = vmul.f32 1.0, %v1466
        %v1468 = vxor.u32 %v1459, 2147483648
        %v1469 = vmul.f32 %v1468, 1.442695
        %v1470 = vpow.pop %v1469
        %v1471 = vadd.f32 %v1470, 1.0
        %v1472 = vrcp.pop %v1471
        %v1473 = vmul.f32 1.0, %v1472
        %v1474 = vtanh.pop %v1460
        %v1475 = vxor.u32 %v1461, 2147483648
        %v1476 = vmul.f32 %v1475, 1.442695
        %v1477 = vpow.pop %v1476
        %v1478 = vadd.f32 %v1477, 1.0
        %v1479 = vrcp.pop %v1478
        %v1480 = vmul.f32 1.0, %v1479
        %v1481 = vmul.f32 %v1473, %v856
        %v1482 = vmul.f32 %v1467, %v1474
        %v1483 = vadd.f32 %v1481, %v1482
        %v1484 = vtanh.pop %v1483
        %v1485 = vmul.f32 %v1480, %v1484
        %v1486 = vpack.c.bf16 %v1485, %v1485
        %v1487 = vpack.c.bf16 %v1371, %v1371
        %1488 = vmatprep.subr.bf16.mxu0 %v1167
        %1489 = vmatpush1.bf16.msra.mxu0 %v1166
        %1490 = vmatprep.subr.bf16.mxu0 %v1163
        %1491 = vmatpush1.bf16.msra.mxu0 %v1162
        %1492 = vmatprep.subr.bf16.mxu0 %v1159
        %1493 = vmatpush1.bf16.msra.mxu0 %v1158
        %1494 = vmatprep.subr.bf16.mxu0 %v1155
        %1495 = vmatpush1.bf16.msra.mxu0 %v1154
        %1496 = vmatprep.subr.bf16.mxu0 %v1151
        %1497 = vmatpush1.bf16.msra.mxu0 %v1150
        %1498 = vmatprep.subr.bf16.mxu0 %v1147
        %1499 = vmatpush1.bf16.msra.mxu0 %v1146
        %1500 = vmatprep.subr.bf16.mxu0 %v1143
        %1501 = vmatpush1.bf16.msra.mxu0 %v1142
        %1502 = vmatprep.subr.bf16.mxu0 %v1139
        %1503 = vmatpush1.bf16.msra.mxu0 %v1138
        %1504 = vmatprep.subr.bf16.mxu0 %v1199
        %1505 = vmatpush2.bf16.msra.mxu0 %v1198
        %1506 = vmatprep.subr.bf16.mxu0 %v1195
        %1507 = vmatpush2.bf16.msra.mxu0 %v1194
        %1508 = vmatprep.subr.bf16.mxu0 %v1191
        %1509 = vmatpush2.bf16.msra.mxu0 %v1190
        %1510 = vmatprep.subr.bf16.mxu0 %v1187
        %1511 = vmatpush2.bf16.msra.mxu0 %v1186
        %1512 = vmatprep.subr.bf16.mxu0 %v1183
        %1513 = vmatpush2.bf16.msra.mxu0 %v1182
        %1514 = vmatprep.subr.bf16.mxu0 %v1179
        %1515 = vmatpush2.bf16.msra.mxu0 %v1178
        %1516 = vmatprep.subr.bf16.mxu0 %v1175
        %1517 = vmatpush2.bf16.msra.mxu0 %v1174
        %1518 = vmatprep.subr.bf16.mxu0 %v1171
        %1519 = vmatpush2.bf16.msra.mxu0 %v1170
        %1520 = vmatprep.mubr.bf16.mxu0 %v1487
        %1521 = vmatmul.mubr.bf16.gmra.mxu0 %v1486
        %v1522 = vpop.f32.mrf.mxu0
        %v1523 = vadd.f32 %v929, %v1522
        %v1524 = vpop.f32.mrf.mxu0
        %v1525 = vadd.f32 %v933, %v1524
        %v1526 = vpop.f32.mrf.mxu0
        %v1527 = vpop.f32.mrf.mxu0
        %1528 = vdwg.mxu0
        %1529 = vmatprep.subr.bf16.mxu0 %v1169
        %1530 = vmatpush1.bf16.msra.mxu0 %v1168
        %1531 = vmatprep.subr.bf16.mxu0 %v1165
        %1532 = vmatpush1.bf16.msra.mxu0 %v1164
        %1533 = vmatprep.subr.bf16.mxu0 %v1161
        %1534 = vmatpush1.bf16.msra.mxu0 %v1160
        %1535 = vmatprep.subr.bf16.mxu0 %v1157
        %1536 = vmatpush1.bf16.msra.mxu0 %v1156
        %1537 = vmatprep.subr.bf16.mxu0 %v1153
        %1538 = vmatpush1.bf16.msra.mxu0 %v1152
        %1539 = vmatprep.subr.bf16.mxu0 %v1149
        %1540 = vmatpush1.bf16.msra.mxu0 %v1148
        %1541 = vmatprep.subr.bf16.mxu0 %v1145
        %1542 = vmatpush1.bf16.msra.mxu0 %v1144
        %1543 = vmatprep.subr.bf16.mxu0 %v1141
        %1544 = vmatpush1.bf16.msra.mxu0 %v1140
        %1545 = vmatprep.subr.bf16.mxu0 %v1201
        %1546 = vmatpush2.bf16.msra.mxu0 %v1200
        %1547 = vmatprep.subr.bf16.mxu0 %v1197
        %1548 = vmatpush2.bf16.msra.mxu0 %v1196
        %1549 = vmatprep.subr.bf16.mxu0 %v1193
        %1550 = vmatpush2.bf16.msra.mxu0 %v1192
        %1551 = vmatprep.subr.bf16.mxu0 %v1189
        %1552 = vmatpush2.bf16.msra.mxu0 %v1188
        %1553 = vmatprep.subr.bf16.mxu0 %v1185
        %1554 = vmatpush2.bf16.msra.mxu0 %v1184
        %1555 = vmatprep.subr.bf16.mxu0 %v1181
        %1556 = vmatpush2.bf16.msra.mxu0 %v1180
        %1557 = vmatprep.subr.bf16.mxu0 %v1177
        %1558 = vmatpush2.bf16.msra.mxu0 %v1176
        %1559 = vmatprep.subr.bf16.mxu0 %v1173
        %1560 = vmatpush2.bf16.msra.mxu0 %v1172
        %1561 = vmatprep.mubr.bf16.mxu0 %v1487
        %1562 = vmatmul.mubr.bf16.gmra.mxu0 %v1486
        %v1563 = vpop.f32.mrf.mxu0
        %v1564 = vadd.f32 %v937, %v1563
        %v1565 = vpop.f32.mrf.mxu0
        %v1566 = vadd.f32 %v941, %v1565
        %v1567 = vpop.f32.mrf.mxu0
        %v1568 = vpop.f32.mrf.mxu0
        %1569 = vdwg.mxu0
        %v1570 = vxor.u32 %v1523, 2147483648
        %v1571 = vmul.f32 %v1570, 1.442695
        %v1572 = vpow.pop %v1571
        %v1573 = vadd.f32 %v1572, 1.0
        %v1574 = vrcp.pop %v1573
        %v1575 = vmul.f32 1.0, %v1574
        %v1576 = vxor.u32 %v1525, 2147483648
        %v1577 = vmul.f32 %v1576, 1.442695
        %v1578 = vpow.pop %v1577
        %v1579 = vadd.f32 %v1578, 1.0
        %v1580 = vrcp.pop %v1579
        %v1581 = vmul.f32 1.0, %v1580
        %v1582 = vtanh.pop %v1564
        %v1583 = vxor.u32 %v1566, 2147483648
        %v1584 = vmul.f32 %v1583, 1.442695
        %v1585 = vpow.pop %v1584
        %v1586 = vadd.f32 %v1585, 1.0
        %v1587 = vrcp.pop %v1586
        %v1588 = vmul.f32 1.0, %v1587
        %v1589 = vmul.f32 %v1581, %v1369
        %v1590 = vmul.f32 %v1575, %v1582
        %v1591 = vadd.f32 %v1589, %v1590
        %v1592 = vtanh.pop %v1591
        %v1593 = vmul.f32 %v1588, %v1592
        %1594 = vmatprep.subr.bf16.mxu0 %v689
        %1595 = vmatpush1.bf16.msra.mxu0 %v688
        %1596 = vmatprep.subr.bf16.mxu0 %v685
        %1597 = vmatpush1.bf16.msra.mxu0 %v684
        %1598 = vmatprep.subr.bf16.mxu0 %v681
        %1599 = vmatpush1.bf16.msra.mxu0 %v680
        %1600 = vmatprep.subr.bf16.mxu0 %v677
        %1601 = vmatpush1.bf16.msra.mxu0 %v676
        %1602 = vmatprep.subr.bf16.mxu0 %v673
        %1603 = vmatpush1.bf16.msra.mxu0 %v672
        %1604 = vmatprep.subr.bf16.mxu0 %v669
        %1605 = vmatpush1.bf16.msra.mxu0 %v668
        %1606 = vmatprep.subr.bf16.mxu0 %v665
        %1607 = vmatpush1.bf16.msra.mxu0 %v664
        %1608 = vmatprep.subr.bf16.mxu0 %v661
        %1609 = vmatpush1.bf16.msra.mxu0 %v660
        %1610 = vmatprep.subr.bf16.mxu0 0
        %1611 = vmatpush2.bf16.msra.mxu0 0
        %1612 = vmatprep.subr.bf16.mxu0 0
        %1613 = vmatpush2.bf16.msra.mxu0 0
        %1614 = vmatprep.subr.bf16.mxu0 0
        %1615 = vmatpush2.bf16.msra.mxu0 0
        %1616 = vmatprep.subr.bf16.mxu0 0
        %1617 = vmatpush2.bf16.msra.mxu0 0
        %1618 = vmatprep.subr.bf16.mxu0 0
        %1619 = vmatpush2.bf16.msra.mxu0 0
        %1620 = vmatprep.subr.bf16.mxu0 0
        %1621 = vmatpush2.bf16.msra.mxu0 0
        %1622 = vmatprep.subr.bf16.mxu0 0
        %1623 = vmatpush2.bf16.msra.mxu0 0
        %1624 = vmatprep.subr.bf16.mxu0 0
        %1625 = vmatpush2.bf16.msra.mxu0 0
        %1626 = vmatprep.mubr.bf16.mxu0 0
        %1627 = vmatmul.mubr.bf16.gmra.mxu0 %v1486
        %v1628 = vpop.f32.mrf.mxu0
        %v1629 = vadd.f32 0.0, %v1628
        %v1630 = vpop.f32.mrf.mxu0
        %v1631 = vadd.f32 0.0, %v1630
        %v1632 = vpop.f32.mrf.mxu0
        %v1633 = vpop.f32.mrf.mxu0
        %1634 = vdwg.mxu0
        %1635 = vmatprep.subr.bf16.mxu0 %v691
        %1636 = vmatpush1.bf16.msra.mxu0 %v690
        %1637 = vmatprep.subr.bf16.mxu0 %v687
        %1638 = vmatpush1.bf16.msra.mxu0 %v686
        %1639 = vmatprep.subr.bf16.mxu0 %v683
        %1640 = vmatpush1.bf16.msra.mxu0 %v682
        %1641 = vmatprep.subr.bf16.mxu0 %v679
        %1642 = vmatpush1.bf16.msra.mxu0 %v678
        %1643 = vmatprep.subr.bf16.mxu0 %v675
        %1644 = vmatpush1.bf16.msra.mxu0 %v674
        %1645 = vmatprep.subr.bf16.mxu0 %v671
        %1646 = vmatpush1.bf16.msra.mxu0 %v670
        %1647 = vmatprep.subr.bf16.mxu0 %v667
        %1648 = vmatpush1.bf16.msra.mxu0 %v666
        %1649 = vmatprep.subr.bf16.mxu0 %v663
        %1650 = vmatpush1.bf16.msra.mxu0 %v662
        %1651 = vmatprep.subr.bf16.mxu0 0
        %1652 = vmatpush2.bf16.msra.mxu0 0
        %1653 = vmatprep.subr.bf16.mxu0 0
        %1654 = vmatpush2.bf16.msra.mxu0 0
        %1655 = vmatprep.subr.bf16.mxu0 0
        %1656 = vmatpush2.bf16.msra.mxu0 0
        %1657 = vmatprep.subr.bf16.mxu0 0
        %1658 = vmatpush2.bf16.msra.mxu0 0
        %1659 = vmatprep.subr.bf16.mxu0 0
        %1660 = vmatpush2.bf16.msra.mxu0 0
        %1661 = vmatprep.subr.bf16.mxu0 0
        %1662 = vmatpush2.bf16.msra.mxu0 0
        %1663 = vmatprep.subr.bf16.mxu0 0
        %1664 = vmatpush2.bf16.msra.mxu0 0
        %1665 = vmatprep.subr.bf16.mxu0 0
        %1666 = vmatpush2.bf16.msra.mxu0 0
        %1667 = vmatprep.mubr.bf16.mxu0 0
        %1668 = vmatmul.mubr.bf16.gmra.mxu0 %v1486
        %v1669 = vpop.f32.mrf.mxu0
        %v1670 = vadd.f32 0.0, %v1669
        %v1671 = vpop.f32.mrf.mxu0
        %v1672 = vadd.f32 0.0, %v1671
        %v1673 = vpop.f32.mrf.mxu0
        %v1674 = vpop.f32.mrf.mxu0
        %1675 = vdwg.mxu0
        %v1676 = vadd.f32 %v464, %v1629
        %v1677 = vadd.f32 %v466, %v1631
        %v1678 = vadd.f32 %v517, %v1670
        %v1679 = vadd.f32 %v519, %v1672
        %v1680 = vadd.f32 %v1676, %v814
        %v1681 = vadd.f32 %v1677, %v818
        %v1682 = vadd.f32 %v1678, %v822
        %v1683 = vadd.f32 %v1679, %v826
        %v1684 = vxor.u32 %v1680, 2147483648
        %v1685 = vmul.f32 %v1684, 1.442695
        %v1686 = vpow.pop %v1685
        %v1687 = vadd.f32 %v1686, 1.0
        %v1688 = vrcp.pop %v1687
        %v1689 = vmul.f32 1.0, %v1688
        %v1690 = vxor.u32 %v1681, 2147483648
        %v1691 = vmul.f32 %v1690, 1.442695
        %v1692 = vpow.pop %v1691
        %v1693 = vadd.f32 %v1692, 1.0
        %v1694 = vrcp.pop %v1693
        %v1695 = vmul.f32 1.0, %v1694
        %v1696 = vtanh.pop %v1682
        %v1697 = vxor.u32 %v1683, 2147483648
        %v1698 = vmul.f32 %v1697, 1.442695
        %v1699 = vpow.pop %v1698
        %v1700 = vadd.f32 %v1699, 1.0
        %v1701 = vrcp.pop %v1700
        %v1702 = vmul.f32 1.0, %v1701
        %v1703 = vmul.f32 %v1695, %v1483
        %v1704 = vmul.f32 %v1689, %v1696
        %v1705 = vadd.f32 %v1703, %v1704
        %v1706 = vtanh.pop %v1705
        %v1707 = vmul.f32 %v1702, %v1706
        %v1708 = vpack.c.bf16 %v1707, %v1707
        %v1709 = vpack.c.bf16 %v1593, %v1593
        %1710 = vmatprep.subr.bf16.mxu0 %v1167
        %1711 = vmatpush1.bf16.msra.mxu0 %v1166
        %1712 = vmatprep.subr.bf16.mxu0 %v1163
        %1713 = vmatpush1.bf16.msra.mxu0 %v1162
        %1714 = vmatprep.subr.bf16.mxu0 %v1159
        %1715 = vmatpush1.bf16.msra.mxu0 %v1158
        %1716 = vmatprep.subr.bf16.mxu0 %v1155
        %1717 = vmatpush1.bf16.msra.mxu0 %v1154
        %1718 = vmatprep.subr.bf16.mxu0 %v1151
        %1719 = vmatpush1.bf16.msra.mxu0 %v1150
        %1720 = vmatprep.subr.bf16.mxu0 %v1147
        %1721 = vmatpush1.bf16.msra.mxu0 %v1146
        %1722 = vmatprep.subr.bf16.mxu0 %v1143
        %1723 = vmatpush1.bf16.msra.mxu0 %v1142
        %1724 = vmatprep.subr.bf16.mxu0 %v1139
        %1725 = vmatpush1.bf16.msra.mxu0 %v1138
        %1726 = vmatprep.subr.bf16.mxu0 %v1199
        %1727 = vmatpush2.bf16.msra.mxu0 %v1198
        %1728 = vmatprep.subr.bf16.mxu0 %v1195
        %1729 = vmatpush2.bf16.msra.mxu0 %v1194
        %1730 = vmatprep.subr.bf16.mxu0 %v1191
        %1731 = vmatpush2.bf16.msra.mxu0 %v1190
        %1732 = vmatprep.subr.bf16.mxu0 %v1187
        %1733 = vmatpush2.bf16.msra.mxu0 %v1186
        %1734 = vmatprep.subr.bf16.mxu0 %v1183
        %1735 = vmatpush2.bf16.msra.mxu0 %v1182
        %1736 = vmatprep.subr.bf16.mxu0 %v1179
        %1737 = vmatpush2.bf16.msra.mxu0 %v1178
        %1738 = vmatprep.subr.bf16.mxu0 %v1175
        %1739 = vmatpush2.bf16.msra.mxu0 %v1174
        %1740 = vmatprep.subr.bf16.mxu0 %v1171
        %1741 = vmatpush2.bf16.msra.mxu0 %v1170
        %1742 = vmatprep.mubr.bf16.mxu0 %v1709
        %1743 = vmatmul.mubr.bf16.gmra.mxu0 %v1708
        %v1744 = vpop.f32.mrf.mxu0
        %v1745 = vadd.f32 %v929, %v1744
        %v1746 = vpop.f32.mrf.mxu0
        %v1747 = vadd.f32 %v933, %v1746
        %v1748 = vpop.f32.mrf.mxu0
        %v1749 = vpop.f32.mrf.mxu0
        %1750 = vdwg.mxu0
        %1751 = vmatprep.subr.bf16.mxu0 %v1169
        %1752 = vmatpush1.bf16.msra.mxu0 %v1168
        %1753 = vmatprep.subr.bf16.mxu0 %v1165
        %1754 = vmatpush1.bf16.msra.mxu0 %v1164
        %1755 = vmatprep.subr.bf16.mxu0 %v1161
        %1756 = vmatpush1.bf16.msra.mxu0 %v1160
        %1757 = vmatprep.subr.bf16.mxu0 %v1157
        %1758 = vmatpush1.bf16.msra.mxu0 %v1156
        %1759 = vmatprep.subr.bf16.mxu0 %v1153
        %1760 = vmatpush1.bf16.msra.mxu0 %v1152
        %1761 = vmatprep.subr.bf16.mxu0 %v1149
        %1762 = vmatpush1.bf16.msra.mxu0 %v1148
        %1763 = vmatprep.subr.bf16.mxu0 %v1145
        %1764 = vmatpush1.bf16.msra.mxu0 %v1144
        %1765 = vmatprep.subr.bf16.mxu0 %v1141
        %1766 = vmatpush1.bf16.msra.mxu0 %v1140
        %1767 = vmatprep.subr.bf16.mxu0 %v1201
        %1768 = vmatpush2.bf16.msra.mxu0 %v1200
        %1769 = vmatprep.subr.bf16.mxu0 %v1197
        %1770 = vmatpush2.bf16.msra.mxu0 %v1196
        %1771 = vmatprep.subr.bf16.mxu0 %v1193
        %1772 = vmatpush2.bf16.msra.mxu0 %v1192
        %1773 = vmatprep.subr.bf16.mxu0 %v1189
        %1774 = vmatpush2.bf16.msra.mxu0 %v1188
        %1775 = vmatprep.subr.bf16.mxu0 %v1185
        %1776 = vmatpush2.bf16.msra.mxu0 %v1184
        %1777 = vmatprep.subr.bf16.mxu0 %v1181
        %1778 = vmatpush2.bf16.msra.mxu0 %v1180
        %1779 = vmatprep.subr.bf16.mxu0 %v1177
        %1780 = vmatpush2.bf16.msra.mxu0 %v1176
        %1781 = vmatprep.subr.bf16.mxu0 %v1173
        %1782 = vmatpush2.bf16.msra.mxu0 %v1172
        %1783 = vmatprep.mubr.bf16.mxu0 %v1709
        %1784 = vmatmul.mubr.bf16.gmra.mxu0 %v1708
        %v1785 = vpop.f32.mrf.mxu0
        %v1786 = vadd.f32 %v937, %v1785
        %v1787 = vpop.f32.mrf.mxu0
        %v1788 = vadd.f32 %v941, %v1787
        %v1789 = vpop.f32.mrf.mxu0
        %v1790 = vpop.f32.mrf.mxu0
        %1791 = vdwg.mxu0
        %v1792 = vxor.u32 %v1745, 2147483648
        %v1793 = vmul.f32 %v1792, 1.442695
        %v1794 = vpow.pop %v1793
        %v1795 = vadd.f32 %v1794, 1.0
        %v1796 = vrcp.pop %v1795
        %v1797 = vmul.f32 1.0, %v1796
        %v1798 = vxor.u32 %v1747, 2147483648
        %v1799 = vmul.f32 %v1798, 1.442695
        %v1800 = vpow.pop %v1799
        %v1801 = vadd.f32 %v1800, 1.0
        %v1802 = vrcp.pop %v1801
        %v1803 = vmul.f32 1.0, %v1802
        %v1804 = vtanh.pop %v1786
        %v1805 = vxor.u32 %v1788, 2147483648
        %v1806 = vmul.f32 %v1805, 1.442695
        %v1807 = vpow.pop %v1806
        %v1808 = vadd.f32 %v1807, 1.0
        %v1809 = vrcp.pop %v1808
        %v1810 = vmul.f32 1.0, %v1809
        %v1811 = vmul.f32 %v1803, %v1591
        %v1812 = vmul.f32 %v1797, %v1804
        %v1813 = vadd.f32 %v1811, %v1812
        %v1814 = vtanh.pop %v1813
        %v1815 = vmul.f32 %v1810, %v1814
        %1816 = vmatprep.subr.bf16.mxu0 %v689
        %1817 = vmatpush1.bf16.msra.mxu0 %v688
        %1818 = vmatprep.subr.bf16.mxu0 %v685
        %1819 = vmatpush1.bf16.msra.mxu0 %v684
        %1820 = vmatprep.subr.bf16.mxu0 %v681
        %1821 = vmatpush1.bf16.msra.mxu0 %v680
        %1822 = vmatprep.subr.bf16.mxu0 %v677
        %1823 = vmatpush1.bf16.msra.mxu0 %v676
        %1824 = vmatprep.subr.bf16.mxu0 %v673
        %1825 = vmatpush1.bf16.msra.mxu0 %v672
        %1826 = vmatprep.subr.bf16.mxu0 %v669
        %1827 = vmatpush1.bf16.msra.mxu0 %v668
        %1828 = vmatprep.subr.bf16.mxu0 %v665
        %1829 = vmatpush1.bf16.msra.mxu0 %v664
        %1830 = vmatprep.subr.bf16.mxu0 %v661
        %1831 = vmatpush1.bf16.msra.mxu0 %v660
        %1832 = vmatprep.subr.bf16.mxu0 0
        %1833 = vmatpush2.bf16.msra.mxu0 0
        %1834 = vmatprep.subr.bf16.mxu0 0
        %1835 = vmatpush2.bf16.msra.mxu0 0
        %1836 = vmatprep.subr.bf16.mxu0 0
        %1837 = vmatpush2.bf16.msra.mxu0 0
        %1838 = vmatprep.subr.bf16.mxu0 0
        %1839 = vmatpush2.bf16.msra.mxu0 0
        %1840 = vmatprep.subr.bf16.mxu0 0
        %1841 = vmatpush2.bf16.msra.mxu0 0
        %1842 = vmatprep.subr.bf16.mxu0 0
        %1843 = vmatpush2.bf16.msra.mxu0 0
        %1844 = vmatprep.subr.bf16.mxu0 0
        %1845 = vmatpush2.bf16.msra.mxu0 0
        %1846 = vmatprep.subr.bf16.mxu0 0
        %1847 = vmatpush2.bf16.msra.mxu0 0
        %1848 = vmatprep.mubr.bf16.mxu0 0
        %1849 = vmatmul.mubr.bf16.gmra.mxu0 %v1708
        %v1850 = vpop.f32.mrf.mxu0
        %v1851 = vadd.f32 0.0, %v1850
        %v1852 = vpop.f32.mrf.mxu0
        %v1853 = vadd.f32 0.0, %v1852
        %v1854 = vpop.f32.mrf.mxu0
        %v1855 = vpop.f32.mrf.mxu0
        %1856 = vdwg.mxu0
        %1857 = vmatprep.subr.bf16.mxu0 %v691
        %1858 = vmatpush1.bf16.msra.mxu0 %v690
        %1859 = vmatprep.subr.bf16.mxu0 %v687
        %1860 = vmatpush1.bf16.msra.mxu0 %v686
        %1861 = vmatprep.subr.bf16.mxu0 %v683
        %1862 = vmatpush1.bf16.msra.mxu0 %v682
        %1863 = vmatprep.subr.bf16.mxu0 %v679
        %1864 = vmatpush1.bf16.msra.mxu0 %v678
        %1865 = vmatprep.subr.bf16.mxu0 %v675
        %1866 = vmatpush1.bf16.msra.mxu0 %v674
        %1867 = vmatprep.subr.bf16.mxu0 %v671
        %1868 = vmatpush1.bf16.msra.mxu0 %v670
        %1869 = vmatprep.subr.bf16.mxu0 %v667
        %1870 = vmatpush1.bf16.msra.mxu0 %v666
        %1871 = vmatprep.subr.bf16.mxu0 %v663
        %1872 = vmatpush1.bf16.msra.mxu0 %v662
        %1873 = vmatprep.subr.bf16.mxu0 0
        %1874 = vmatpush2.bf16.msra.mxu0 0
        %1875 = vmatprep.subr.bf16.mxu0 0
        %1876 = vmatpush2.bf16.msra.mxu0 0
        %1877 = vmatprep.subr.bf16.mxu0 0
        %1878 = vmatpush2.bf16.msra.mxu0 0
        %1879 = vmatprep.subr.bf16.mxu0 0
        %1880 = vmatpush2.bf16.msra.mxu0 0
        %1881 = vmatprep.subr.bf16.mxu0 0
        %1882 = vmatpush2.bf16.msra.mxu0 0
        %1883 = vmatprep.subr.bf16.mxu0 0
        %1884 = vmatpush2.bf16.msra.mxu0 0
        %1885 = vmatprep.subr.bf16.mxu0 0
        %1886 = vmatpush2.bf16.msra.mxu0 0
        %1887 = vmatprep.subr.bf16.mxu0 0
        %1888 = vmatpush2.bf16.msra.mxu0 0
        %1889 = vmatprep.mubr.bf16.mxu0 0
        %1890 = vmatmul.mubr.bf16.gmra.mxu0 %v1708
        %v1891 = vpop.f32.mrf.mxu0
        %v1892 = vadd.f32 0.0, %v1891
        %v1893 = vpop.f32.mrf.mxu0
        %v1894 = vadd.f32 0.0, %v1893
        %v1895 = vpop.f32.mrf.mxu0
        %v1896 = vpop.f32.mrf.mxu0
        %1897 = vdwg.mxu0
        %v1898 = vadd.f32 %v468, %v1851
        %v1899 = vadd.f32 %v470, %v1853
        %v1900 = vadd.f32 %v521, %v1892
        %v1901 = vadd.f32 %v523, %v1894
        %v1902 = vadd.f32 %v1898, %v814
        %v1903 = vadd.f32 %v1899, %v818
        %v1904 = vadd.f32 %v1900, %v822
        %v1905 = vadd.f32 %v1901, %v826
        %v1906 = vxor.u32 %v1902, 2147483648
        %v1907 = vmul.f32 %v1906, 1.442695
        %v1908 = vpow.pop %v1907
        %v1909 = vadd.f32 %v1908, 1.0
        %v1910 = vrcp.pop %v1909
        %v1911 = vmul.f32 1.0, %v1910
        %v1912 = vxor.u32 %v1903, 2147483648
        %v1913 = vmul.f32 %v1912, 1.442695
        %v1914 = vpow.pop %v1913
        %v1915 = vadd.f32 %v1914, 1.0
        %v1916 = vrcp.pop %v1915
        %v1917 = vmul.f32 1.0, %v1916
        %v1918 = vtanh.pop %v1904
        %v1919 = vxor.u32 %v1905, 2147483648
        %v1920 = vmul.f32 %v1919, 1.442695
        %v1921 = vpow.pop %v1920
        %v1922 = vadd.f32 %v1921, 1.0
        %v1923 = vrcp.pop %v1922
        %v1924 = vmul.f32 1.0, %v1923
        %v1925 = vmul.f32 %v1917, %v1705
        %v1926 = vmul.f32 %v1911, %v1918
        %v1927 = vadd.f32 %v1925, %v1926
        %v1928 = vtanh.pop %v1927
        %v1929 = vmul.f32 %v1924, %v1928
        %v1930 = vpack.c.bf16 %v1929, %v1929
        %v1931 = vpack.c.bf16 %v1815, %v1815
        %1932 = vmatprep.subr.bf16.mxu0 %v1167
        %1933 = vmatpush1.bf16.msra.mxu0 %v1166
        %1934 = vmatprep.subr.bf16.mxu0 %v1163
        %1935 = vmatpush1.bf16.msra.mxu0 %v1162
        %1936 = vmatprep.subr.bf16.mxu0 %v1159
        %1937 = vmatpush1.bf16.msra.mxu0 %v1158
        %1938 = vmatprep.subr.bf16.mxu0 %v1155
        %1939 = vmatpush1.bf16.msra.mxu0 %v1154
        %1940 = vmatprep.subr.bf16.mxu0 %v1151
        %1941 = vmatpush1.bf16.msra.mxu0 %v1150
        %1942 = vmatprep.subr.bf16.mxu0 %v1147
        %1943 = vmatpush1.bf16.msra.mxu0 %v1146
        %1944 = vmatprep.subr.bf16.mxu0 %v1143
        %1945 = vmatpush1.bf16.msra.mxu0 %v1142
        %1946 = vmatprep.subr.bf16.mxu0 %v1139
        %1947 = vmatpush1.bf16.msra.mxu0 %v1138
        %1948 = vmatprep.subr.bf16.mxu0 %v1199
        %1949 = vmatpush2.bf16.msra.mxu0 %v1198
        %1950 = vmatprep.subr.bf16.mxu0 %v1195
        %1951 = vmatpush2.bf16.msra.mxu0 %v1194
        %1952 = vmatprep.subr.bf16.mxu0 %v1191
        %1953 = vmatpush2.bf16.msra.mxu0 %v1190
        %1954 = vmatprep.subr.bf16.mxu0 %v1187
        %1955 = vmatpush2.bf16.msra.mxu0 %v1186
        %1956 = vmatprep.subr.bf16.mxu0 %v1183
        %1957 = vmatpush2.bf16.msra.mxu0 %v1182
        %1958 = vmatprep.subr.bf16.mxu0 %v1179
        %1959 = vmatpush2.bf16.msra.mxu0 %v1178
        %1960 = vmatprep.subr.bf16.mxu0 %v1175
        %1961 = vmatpush2.bf16.msra.mxu0 %v1174
        %1962 = vmatprep.subr.bf16.mxu0 %v1171
        %1963 = vmatpush2.bf16.msra.mxu0 %v1170
        %1964 = vmatprep.mubr.bf16.mxu0 %v1931
        %1965 = vmatmul.mubr.bf16.gmra.mxu0 %v1930
        %v1966 = vpop.f32.mrf.mxu0
        %v1967 = vadd.f32 %v929, %v1966
        %v1968 = vpop.f32.mrf.mxu0
        %v1969 = vadd.f32 %v933, %v1968
        %v1970 = vpop.f32.mrf.mxu0
        %v1971 = vpop.f32.mrf.mxu0
        %1972 = vdwg.mxu0
        %1973 = vmatprep.subr.bf16.mxu0 %v1169
        %1974 = vmatpush1.bf16.msra.mxu0 %v1168
        %1975 = vmatprep.subr.bf16.mxu0 %v1165
        %1976 = vmatpush1.bf16.msra.mxu0 %v1164
        %1977 = vmatprep.subr.bf16.mxu0 %v1161
        %1978 = vmatpush1.bf16.msra.mxu0 %v1160
        %1979 = vmatprep.subr.bf16.mxu0 %v1157
        %1980 = vmatpush1.bf16.msra.mxu0 %v1156
        %1981 = vmatprep.subr.bf16.mxu0 %v1153
        %1982 = vmatpush1.bf16.msra.mxu0 %v1152
        %1983 = vmatprep.subr.bf16.mxu0 %v1149
        %1984 = vmatpush1.bf16.msra.mxu0 %v1148
        %1985 = vmatprep.subr.bf16.mxu0 %v1145
        %1986 = vmatpush1.bf16.msra.mxu0 %v1144
        %1987 = vmatprep.subr.bf16.mxu0 %v1141
        %1988 = vmatpush1.bf16.msra.mxu0 %v1140
        %1989 = vmatprep.subr.bf16.mxu0 %v1201
        %1990 = vmatpush2.bf16.msra.mxu0 %v1200
        %1991 = vmatprep.subr.bf16.mxu0 %v1197
        %1992 = vmatpush2.bf16.msra.mxu0 %v1196
        %1993 = vmatprep.subr.bf16.mxu0 %v1193
        %1994 = vmatpush2.bf16.msra.mxu0 %v1192
        %1995 = vmatprep.subr.bf16.mxu0 %v1189
        %1996 = vmatpush2.bf16.msra.mxu0 %v1188
        %1997 = vmatprep.subr.bf16.mxu0 %v1185
        %1998 = vmatpush2.bf16.msra.mxu0 %v1184
        %1999 = vmatprep.subr.bf16.mxu0 %v1181
        %2000 = vmatpush2.bf16.msra.mxu0 %v1180
        %2001 = vmatprep.subr.bf16.mxu0 %v1177
        %2002 = vmatpush2.bf16.msra.mxu0 %v1176
        %2003 = vmatprep.subr.bf16.mxu0 %v1173
        %2004 = vmatpush2.bf16.msra.mxu0 %v1172
        %2005 = vmatprep.mubr.bf16.mxu0 %v1931
        %2006 = vmatmul.mubr.bf16.gmra.mxu0 %v1930
        %v2007 = vpop.f32.mrf.mxu0
        %v2008 = vadd.f32 %v937, %v2007
        %v2009 = vpop.f32.mrf.mxu0
        %v2010 = vadd.f32 %v941, %v2009
        %v2011 = vpop.f32.mrf.mxu0
        %v2012 = vpop.f32.mrf.mxu0
        %2013 = vdwg.mxu0
        %v2014 = vxor.u32 %v1967, 2147483648
        %v2015 = vmul.f32 %v2014, 1.442695
        %v2016 = vpow.pop %v2015
        %v2017 = vadd.f32 %v2016, 1.0
        %v2018 = vrcp.pop %v2017
        %v2019 = vmul.f32 1.0, %v2018
        %v2020 = vxor.u32 %v1969, 2147483648
        %v2021 = vmul.f32 %v2020, 1.442695
        %v2022 = vpow.pop %v2021
        %v2023 = vadd.f32 %v2022, 1.0
        %v2024 = vrcp.pop %v2023
        %v2025 = vmul.f32 1.0, %v2024
        %v2026 = vtanh.pop %v2008
        %v2027 = vxor.u32 %v2010, 2147483648
        %v2028 = vmul.f32 %v2027, 1.442695
        %v2029 = vpow.pop %v2028
        %v2030 = vadd.f32 %v2029, 1.0
        %v2031 = vrcp.pop %v2030
        %v2032 = vmul.f32 1.0, %v2031
        %v2033 = vmul.f32 %v2025, %v1813
        %v2034 = vmul.f32 %v2019, %v2026
        %v2035 = vadd.f32 %v2033, %v2034
        %v2036 = vtanh.pop %v2035
        %v2037 = vmul.f32 %v2032, %v2036
        %2038 = vst [vmem:[#allocation2] sm:$0xff] %v1929
        %2039 = vst [vmem:[#allocation3] sm:$0xff] %v1927
        %2040 = vst [vmem:[#allocation4] sm:$0xff] %v2037
        %2041 = vst [vmem:[#allocation5] sm:$0xff] %v2035
        %v2042 = vld [vmem:[#allocation10] sm:$0xff]
        %v2043 = vld [vmem:[#allocation10 + $0x8] sm:$0xff]
        %v2044 = vld [vmem:[#allocation10 + $0x10] sm:$0xff]
        %v2045 = vld [vmem:[#allocation10 + $0x18] sm:$0xff]
        %v2046 = vld [vmem:[#allocation10 + $0x20] sm:$0xff]
        %v2047 = vld [vmem:[#allocation10 + $0x28] sm:$0xff]
        %v2048 = vld [vmem:[#allocation10 + $0x30] sm:$0xff]
        %v2049 = vld [vmem:[#allocation10 + $0x38] sm:$0xff]
        %v2050 = vld [vmem:[#allocation10 + $0x40] sm:$0xff]
        %v2051 = vld [vmem:[#allocation10 + $0x48] sm:$0xff]
        %v2052 = vld [vmem:[#allocation10 + $0x50] sm:$0xff]
        %v2053 = vld [vmem:[#allocation10 + $0x58] sm:$0xff]
        %v2054 = vld [vmem:[#allocation10 + $0x60] sm:$0xff]
        %v2055 = vld [vmem:[#allocation10 + $0x68] sm:$0xff]
        %v2056 = vld [vmem:[#allocation10 + $0x70] sm:$0xff]
        %v2057 = vld [vmem:[#allocation10 + $0x78] sm:$0xff]
        %v2058 = vld [vmem:[%s7] sm:$0x1]
        %v2060 = vlaneseq
        %v2061 = vshrl.u32 %v2060, 7
        %v2062 = vsub.s32 0, %v2061
        %v2063 = vrot.slane %v2058, %v2062
        %2065 = vmatprep.subr.mxu0 0.0
        %2066 = vmatpush1.msra.mxu0 %v2057
        %2067 = vmatprep.subr.mxu0 0.0
        %2068 = vmatpush1.msra.mxu0 %v2056
        %2069 = vmatprep.subr.mxu0 0.0
        %2070 = vmatpush1.msra.mxu0 %v2055
        %2071 = vmatprep.subr.mxu0 0.0
        %2072 = vmatpush1.msra.mxu0 %v2054
        %2073 = vmatprep.subr.mxu0 0.0
        %2074 = vmatpush1.msra.mxu0 %v2053
        %2075 = vmatprep.subr.mxu0 0.0
        %2076 = vmatpush1.msra.mxu0 %v2052
        %2077 = vmatprep.subr.mxu0 0.0
        %2078 = vmatpush1.msra.mxu0 %v2051
        %2079 = vmatprep.subr.mxu0 0.0
        %2080 = vmatpush1.msra.mxu0 %v2050
        %2081 = vmatprep.subr.mxu0 0.0
        %2082 = vmatpush1.msra.mxu0 %v2049
        %2083 = vmatprep.subr.mxu0 0.0
        %2084 = vmatpush1.msra.mxu0 %v2048
        %2085 = vmatprep.subr.mxu0 0.0
        %2086 = vmatpush1.msra.mxu0 %v2047
        %2087 = vmatprep.subr.mxu0 0.0
        %2088 = vmatpush1.msra.mxu0 %v2046
        %2089 = vmatprep.subr.mxu0 0.0
        %2090 = vmatpush1.msra.mxu0 %v2045
        %2091 = vmatprep.subr.mxu0 0.0
        %2092 = vmatpush1.msra.mxu0 %v2044
        %2093 = vmatprep.subr.mxu0 0.0
        %2094 = vmatpush1.msra.mxu0 %v2043
        %2095 = vmatprep.subr.mxu0 0.0
        %2096 = vmatpush1.msra.mxu0 %v2042
        %2097 = vmatprep.subr.mxu0 0.0
        %2098 = vmatpush2.msra.mxu0 0.0
        %2099 = vmatprep.subr.mxu0 0.0
        %2100 = vmatpush2.msra.mxu0 0.0
        %2101 = vmatprep.subr.mxu0 0.0
        %2102 = vmatpush2.msra.mxu0 0.0
        %2103 = vmatprep.subr.mxu0 0.0
        %2104 = vmatpush2.msra.mxu0 0.0
        %2105 = vmatprep.subr.mxu0 0.0
        %2106 = vmatpush2.msra.mxu0 0.0
        %2107 = vmatprep.subr.mxu0 0.0
        %2108 = vmatpush2.msra.mxu0 0.0
        %2109 = vmatprep.subr.mxu0 0.0
        %2110 = vmatpush2.msra.mxu0 0.0
        %2111 = vmatprep.subr.mxu0 0.0
        %2112 = vmatpush2.msra.mxu0 0.0
        %2113 = vmatprep.subr.mxu0 0.0
        %2114 = vmatpush2.msra.mxu0 0.0
        %2115 = vmatprep.subr.mxu0 0.0
        %2116 = vmatpush2.msra.mxu0 0.0
        %2117 = vmatprep.subr.mxu0 0.0
        %2118 = vmatpush2.msra.mxu0 0.0
        %2119 = vmatprep.subr.mxu0 0.0
        %2120 = vmatpush2.msra.mxu0 0.0
        %2121 = vmatprep.subr.mxu0 0.0
        %2122 = vmatpush2.msra.mxu0 0.0
        %2123 = vmatprep.subr.mxu0 0.0
        %2124 = vmatpush2.msra.mxu0 0.0
        %2125 = vmatprep.subr.mxu0 0.0
        %2126 = vmatpush2.msra.mxu0 0.0
        %2127 = vmatprep.subr.mxu0 0.0
        %2128 = vmatpush2.msra.mxu0 0.0
        %2129 = vmatprep.mubr.f32.mxu0 0.0
        %2130 = vmatmul.mubr.f32.gmra.mxu0 %v2037
        %v2131 = vpop.f32.mrf.mxu0
        %v2132 = vadd.f32 %v2063, %v2131
        %v2133 = vpop.f32.mrf.mxu0
        %2134 = vdwg.mxu0
        %2135 = vst [vmem:[%s372] sm:$0xff] %v2132
        %p2136 = scmp.lt.s32.totalorder %s25, 0
        %s2137 = scalar_select %p2136, %s25, 0
        %s2138 = smul.addr %s2137, 8
        %s2139 = scalar_lea.vmem %s8, %s2138
        // Predicated region
        $region69: #{lstm_model_forward.1} parent=51 // pred_check
          %p2140 = pneg %p226
        $region70: #{lstm_model_forward.1} parent=51 // pred_check_branch
          %2142 = sbr.rel (%p2140) target = $region72
        $region71: #{lstm_model_forward.1} parent=51 // pred_region
          _
        $region72: #{lstm_model_forward.1} parent=51 // pred_fallthru
          _
        // Predicated region
        $region73: #{lstm_model_forward.1} parent=51 // pred_check
          %p2143 = pneg %p226
        $region74: #{lstm_model_forward.1} parent=51 // pred_check_branch
          %2145 = sbr.rel (%p2143) target = $region76
        $region75: #{lstm_model_forward.1} parent=51 // pred_region
          %p2146 = scmp.lt.s32.totalorder %s25, 0
          %s2147 = scalar_select %p2146, %s25, 0
          %s2148 = smul.addr %s2147, 8
          %s2149 = scalar_lea.vmem %s8, %s2148
        $region76: #{lstm_model_forward.1} parent=51 // pred_fallthru
          _
      $region52: #{lstm_model_forward.1} parent=5 // pred_fallthru
        _
      %p2150 = scmp.le.s32.totalorder 2, %s16
      // Predicated region
      $region77: #{lstm_model_forward.1} parent=5 // pred_check
        %p2151 = pneg %p2150
      $region78: #{lstm_model_forward.1} parent=5 // pred_check_branch
        %2153 = sbr.rel (%p2151) target = $region80
      $region79: #{lstm_model_forward.1} parent=5 // pred_region
        %s2154 = ssub.s32 %s16, 2
      $region80: #{lstm_model_forward.1} parent=5 // pred_fallthru
        _
    $region6: #{lstm_model_forward.1} parent=1 // loop_footer
      %s20 = sadd.s32 1, %s16
    $region7: #{lstm_model_forward.1} parent=1 // loop_footer_branch
      %15 = sbr.rel target = $region3
    $region8: #{lstm_model_forward.1} parent=1 // loop_exit
      _
    %2155 = vsyncpa [#allocation7], 1
    %s2156 = scalar_lea.sflag [#allocation7], 1
    %2157 = vsyncpa %s2156, 1
    %2158 = vsyncpa [#allocation9], 1

</llo_original>
